<compile_context>
chip_gen: v5e
topology: v5e:2x2
jax: 0.10.0
libtpu: 0.0.40
codegen_flags: <defaults>
</compile_context>

<pallas_src>
import functools

import jax
import jax.numpy as jnp
from jax.experimental import pallas as pl
from jax.experimental.pallas import tpu as pltpu


LANE = 128


def _round_up(n, m):
    return (n + m - 1) // m * m


def _pad2(a, rows, cols):
    r, c = a.shape
    if r == rows and c == cols:
        return a
    return jnp.pad(a, ((0, rows - r), (0, cols - c)))


# ---------------------------------------------------------------------------
# Kernel: full encoder+decoder chain on one batch tile.
# ---------------------------------------------------------------------------
def _autoencoder_kernel(
    x_ref,
    # encoder weights / biases (bf16 weights, f32 biases)
    we1, be1, we2, be2, we3, be3, we4, be4,
    # decoder weights / biases
    wd1, bd1, wd2, bd2, wd3, bd3, wd4, bd4,
    # outputs
    recon_ref, z_ref,
):
    cdt = we1.dtype  # bf16

    def linear(h, w_ref, b_ref, relu):
        # bf16 x bf16 -> f32 accumulate on the MXU; f32 epilogue on the VPU.
        y = jnp.dot(h, w_ref[...], preferred_element_type=jnp.float32)
        y = y + b_ref[...]
        return jnp.maximum(y, 0.0) if relu else y

    # Fused input cast (input arrives unpadded f32).
    h = x_ref[...].astype(cdt)

    # ----- encoder -----
    h = linear(h, we1, be1, True).astype(cdt)    # input_dim -> 256
    h = linear(h, we2, be2, True).astype(cdt)    # 256 -> 128
    h = linear(h, we3, be3, True).astype(cdt)    # 128 -> 32  (padded to 128)
    z_pad = linear(h, we4, be4, False)           # 32 -> latent (padded to 128), f32
    # Store only the real latent columns (lane-masked store, 16x fewer bytes).
    z_ref[...] = z_pad[:, : z_ref.shape[1]].astype(z_ref.dtype)

    # ----- decoder -----
    h = z_pad.astype(cdt)                        # padded latent (pad cols are 0)
    h = linear(h, wd1, bd1, True).astype(cdt)    # latent -> 32 (padded to 128)
    h = linear(h, wd2, bd2, True).astype(cdt)    # 32 -> 128
    h = linear(h, wd3, bd3, True).astype(cdt)    # 128 -> 256
    recon = linear(h, wd4, bd4, False)           # 256 -> input_dim (natural width)
    recon_ref[...] = recon.astype(recon_ref.dtype)


# ---------------------------------------------------------------------------
# One-time parameter preparation (outside jit): pad internal feature dims to
# 128 lanes and cast weights to bf16.  Zero padding is numerically exact
# (zero weight rows/cols, zero bias pad, ReLU(0)=0).  The HBM-facing dims
# (we1 rows = input_dim, wd4 cols = input_dim) stay at their natural size so
# the kernel consumes an unpadded x and emits an unpadded recon directly.
# ---------------------------------------------------------------------------
_LAYER_NAMES = ["e1", "e2", "e3", "e4", "d1", "d2", "d3", "d4"]
_PAD_ROWS = dict(e1=False, e2=True, e3=True, e4=True, d1=True, d2=True, d3=True, d4=True)
_PAD_COLS = dict(e1=True, e2=True, e3=True, e4=True, d1=True, d2=True, d3=True, d4=False)


def prepare_params(params, compute_dtype=jnp.bfloat16):
    out = {}
    for n in _LAYER_NAMES:
        w = params[f"w{n}"]
        b = params[f"b{n}"]
        fi, fo = w.shape
        pi = _round_up(fi, LANE) if _PAD_ROWS[n] else fi
        po = _round_up(fo, LANE) if _PAD_COLS[n] else fo
        out[f"w{n}"] = _pad2(w, pi, po).astype(compute_dtype)   # bf16 weight
        out[f"b{n}"] = _pad2(b, 1, po).astype(jnp.float32)      # f32 bias
    return out


def _choose_tile(B, batch_tile):
    batch_tile = _round_up(max(int(batch_tile), 8), 8)  # defensive sublane align
    tile = min(batch_tile, _round_up(B, 8))
    # v7x has 2 TensorCores: keep >=2 'parallel' grid steps when the batch is
    # large enough to split; on 1-TC v5e/v6e the extra step costs ~0.35us.
    if _round_up(B, tile) // tile < 2 and B >= 256:
        tile = _round_up(pl.cdiv(B, 2), 128)
    return tile


# ---------------------------------------------------------------------------
# Wrapper
# ---------------------------------------------------------------------------
def text_autoencoder_forward(x, prepared_params, *, latent_dim, batch_tile=1024):
    """x: (B, input_dim) float32.  prepared_params: output of prepare_params.

    Returns (x_recon, z) as float32 with shapes (B, input_dim), (B, latent_dim).
    """
    B, input_dim = x.shape

    tile = _choose_tile(B, batch_tile)
    b_pad = _round_up(B, tile)
    if b_pad != B:  # only pads when the batch doesn't divide the tile
        x = jnp.pad(x, ((0, b_pad - B), (0, 0)))

    param_args = []
    for n in _LAYER_NAMES:
        param_args.append(prepared_params[f"w{n}"])
        param_args.append(prepared_params[f"b{n}"])

    grid = (b_pad // tile,)

    in_specs = [pl.BlockSpec((tile, input_dim), lambda i: (i, 0))]
    # Whole-array blocks with a constant block index: weights/biases are DMA'd
    # once and stay resident in VMEM across all grid steps.
    in_specs += [pl.BlockSpec(p.shape, lambda i: (0, 0)) for p in param_args]

    out_specs = [
        pl.BlockSpec((tile, input_dim), lambda i: (i, 0)),   # recon (natural width)
        pl.BlockSpec((tile, latent_dim), lambda i: (i, 0)),  # z     (natural width)
    ]
    out_shape = [
        jax.ShapeDtypeStruct((b_pad, input_dim), jnp.float32),
        jax.ShapeDtypeStruct((b_pad, latent_dim), jnp.float32),
    ]

    recon_p, z_p = pl.pallas_call(
        _autoencoder_kernel,
        grid=grid,
        in_specs=in_specs,
        out_specs=out_specs,
        out_shape=out_shape,
        compiler_params=pltpu.CompilerParams(
            dimension_semantics=("parallel",),
            vmem_limit_bytes=32 * 1024 * 1024,
        ),
    )(x, *param_args)

    if b_pad != B:
        recon_p = recon_p[:B]
        z_p = z_p[:B]
    return recon_p, z_p


# ---------------------------------------------------------------------------
# Deterministic parameter init (xavier-normal weights, zero biases), matching
# the PyTorch module's weights_init.
# ---------------------------------------------------------------------------
def init_params(key, input_dim, latent_dim):
    enc_dims = [(input_dim, 256), (256, 128), (128, 32), (32, latent_dim)]
    dec_dims = [(latent_dim, 32), (32, 128), (128, 256), (256, input_dim)]

    params = {}
    keys = jax.random.split(key, 8)

    def xavier(k, fan_in, fan_out):
        std = (2.0 / (fan_in + fan_out)) ** 0.5
        return std * jax.random.normal(k, (fan_in, fan_out), dtype=jnp.float32)

    for idx, (fi, fo) in enumerate(enc_dims):
        params[f"we{idx+1}"] = xavier(keys[idx], fi, fo)
        params[f"be{idx+1}"] = jnp.zeros((1, fo), dtype=jnp.float32)
    for idx, (fi, fo) in enumerate(dec_dims):
        params[f"wd{idx+1}"] = xavier(keys[4 + idx], fi, fo)
        params[f"bd{idx+1}"] = jnp.zeros((1, fo), dtype=jnp.float32)
    return params


# Pure-JAX reference matching the kernel's precision policy
# (bf16 matmul inputs, f32 accumulation, f32 bias/ReLU) on unpadded params.
def reference_forward(x, params, compute_dtype=jnp.bfloat16):
    def lin(h, w, b, relu):
        y = jnp.dot(h.astype(compute_dtype), w.astype(compute_dtype),
                    preferred_element_type=jnp.float32) + b
        return jnp.maximum(y, 0.0) if relu else y

    h = lin(x, params["we1"], params["be1"], True)
    h = lin(h, params["we2"], params["be2"], True)
    h = lin(h, params["we3"], params["be3"], True)
    z = lin(h, params["we4"], params["be4"], False)
    h = lin(z, params["wd1"], params["bd1"], True)
    h = lin(h, params["wd2"], params["bd2"], True)
    h = lin(h, params["wd3"], params["bd3"], True)
    recon = lin(h, params["wd4"], params["bd4"], False)
    return recon, z


if __name__ == "__main__":
    input_dim = 64
    latent_dim = 8
    batch = 256  # small demo; tile chooser splits it into 2 x 128-row tiles

    key = jax.random.PRNGKey(0)
    k_params, k_x = jax.random.split(key)
    params = init_params(k_params, input_dim, latent_dim)
    prepared = prepare_params(params)   # pad + bf16 cast once, outside jit
    x = jax.random.normal(k_x, (batch, input_dim), dtype=jnp.float32)

    fwd = jax.jit(functools.partial(
        text_autoencoder_forward, latent_dim=latent_dim, batch_tile=1024))
    recon, z = fwd(x, prepared)
    jax.block_until_ready((recon, z))

    recon_ref, z_ref = reference_forward(x, params)
    assert recon.shape == (batch, input_dim)
    assert z.shape == (batch, latent_dim)
    assert jnp.allclose(recon, recon_ref, atol=1e-2, rtol=1e-2), float(
        jnp.max(jnp.abs(recon - recon_ref)))
    assert jnp.allclose(z, z_ref, atol=1e-2, rtol=1e-2), float(
        jnp.max(jnp.abs(z - z_ref)))

    print("KERNEL_OK")
</pallas_src>

<mosaic_0001>
module attributes {stable_mosaic.version = 11 : i64} {
  func.func @_autoencoder_kernel(%arg0: i32, %arg1: memref<128x64xf32, #tpu.memory_space<vmem>>, %arg2: memref<64x256xbf16, #tpu.memory_space<vmem>>, %arg3: memref<1x256xf32, #tpu.memory_space<vmem>>, %arg4: memref<256x128xbf16, #tpu.memory_space<vmem>>, %arg5: memref<1x128xf32, #tpu.memory_space<vmem>>, %arg6: memref<128x128xbf16, #tpu.memory_space<vmem>>, %arg7: memref<1x128xf32, #tpu.memory_space<vmem>>, %arg8: memref<128x128xbf16, #tpu.memory_space<vmem>>, %arg9: memref<1x128xf32, #tpu.memory_space<vmem>>, %arg10: memref<128x128xbf16, #tpu.memory_space<vmem>>, %arg11: memref<1x128xf32, #tpu.memory_space<vmem>>, %arg12: memref<128x128xbf16, #tpu.memory_space<vmem>>, %arg13: memref<1x128xf32, #tpu.memory_space<vmem>>, %arg14: memref<128x256xbf16, #tpu.memory_space<vmem>>, %arg15: memref<1x256xf32, #tpu.memory_space<vmem>>, %arg16: memref<256x64xbf16, #tpu.memory_space<vmem>>, %arg17: memref<1x64xf32, #tpu.memory_space<vmem>>, %arg18: memref<128x64xf32, #tpu.memory_space<vmem>>, %arg19: memref<128x8xf32, #tpu.memory_space<vmem>>) attributes {dimension_semantics = [#tpu.dimension_semantics<parallel>], iteration_bounds = array<i64: 2>, scalar_prefetch = 0 : i64, scratch_operands = 0 : i64, tpu.core_type = #tpu.core_type<tc>, window_params = [{transform_indices = @transform_0, window_bounds = array<i64: 128, 64>}, {pipeline_mode = #tpu.pipeline_mode<synchronous>, transform_indices = @transform_1, window_bounds = array<i64: 64, 256>}, {pipeline_mode = #tpu.pipeline_mode<synchronous>, transform_indices = @transform_2, window_bounds = array<i64: 1, 256>}, {pipeline_mode = #tpu.pipeline_mode<synchronous>, transform_indices = @transform_3, window_bounds = array<i64: 256, 128>}, {pipeline_mode = #tpu.pipeline_mode<synchronous>, transform_indices = @transform_4, window_bounds = array<i64: 1, 128>}, {pipeline_mode = #tpu.pipeline_mode<synchronous>, transform_indices = @transform_5, window_bounds = array<i64: 128, 128>}, {pipeline_mode = #tpu.pipeline_mode<synchronous>, transform_indices = @transform_6, window_bounds = array<i64: 1, 128>}, {pipeline_mode = #tpu.pipeline_mode<synchronous>, transform_indices = @transform_7, window_bounds = array<i64: 128, 128>}, {pipeline_mode = #tpu.pipeline_mode<synchronous>, transform_indices = @transform_8, window_bounds = array<i64: 1, 128>}, {pipeline_mode = #tpu.pipeline_mode<synchronous>, transform_indices = @transform_9, window_bounds = array<i64: 128, 128>}, {pipeline_mode = #tpu.pipeline_mode<synchronous>, transform_indices = @transform_10, window_bounds = array<i64: 1, 128>}, {pipeline_mode = #tpu.pipeline_mode<synchronous>, transform_indices = @transform_11, window_bounds = array<i64: 128, 128>}, {pipeline_mode = #tpu.pipeline_mode<synchronous>, transform_indices = @transform_12, window_bounds = array<i64: 1, 128>}, {pipeline_mode = #tpu.pipeline_mode<synchronous>, transform_indices = @transform_13, window_bounds = array<i64: 128, 256>}, {pipeline_mode = #tpu.pipeline_mode<synchronous>, transform_indices = @transform_14, window_bounds = array<i64: 1, 256>}, {pipeline_mode = #tpu.pipeline_mode<synchronous>, transform_indices = @transform_15, window_bounds = array<i64: 256, 64>}, {pipeline_mode = #tpu.pipeline_mode<synchronous>, transform_indices = @transform_16, window_bounds = array<i64: 1, 64>}, {transform_indices = @transform_17, window_bounds = array<i64: 128, 64>}, {transform_indices = @transform_18, window_bounds = array<i64: 128, 8>}]} {
    %c0 = arith.constant 0 : index
    %c0_0 = arith.constant 0 : index
    %0 = vector.load %arg1[%c0, %c0_0] : memref<128x64xf32, #tpu.memory_space<vmem>>, vector<128x64xf32>
    %1 = arith.truncf %0 : vector<128x64xf32> to vector<128x64xbf16>
    %c0_1 = arith.constant 0 : index
    %c0_2 = arith.constant 0 : index
    %2 = vector.load %arg2[%c0_1, %c0_2] : memref<64x256xbf16, #tpu.memory_space<vmem>>, vector<64x256xbf16>
    %cst = arith.constant dense<0.000000e+00> : vector<128x256xf32>
    %3 = tpu.matmul %1, %2, %cst {dimension_numbers = #tpu.dot_dimension_numbers<[1], [0], [0], [1], [0, 0, 1, 1], [], []>} : vector<128x64xbf16>, vector<64x256xbf16>, vector<128x256xf32> -> vector<128x256xf32>
    %c0_3 = arith.constant 0 : index
    %c0_4 = arith.constant 0 : index
    %4 = vector.load %arg3[%c0_3, %c0_4] : memref<1x256xf32, #tpu.memory_space<vmem>>, vector<1x256xf32>
    %5 = vector.broadcast %4 : vector<1x256xf32> to vector<128x256xf32>
    %6 = arith.addf %3, %5 : vector<128x256xf32>
    %cst_5 = arith.constant 0.000000e+00 : f32
    %7 = vector.broadcast %cst_5 : f32 to vector<128x256xf32>
    %8 = arith.maximumf %6, %7 : vector<128x256xf32>
    %9 = arith.truncf %8 : vector<128x256xf32> to vector<128x256xbf16>
    %c0_6 = arith.constant 0 : index
    %c0_7 = arith.constant 0 : index
    %10 = vector.load %arg4[%c0_6, %c0_7] : memref<256x128xbf16, #tpu.memory_space<vmem>>, vector<256x128xbf16>
    %cst_8 = arith.constant dense<0.000000e+00> : vector<128x128xf32>
    %11 = tpu.matmul %9, %10, %cst_8 {dimension_numbers = #tpu.dot_dimension_numbers<[1], [0], [0], [1], [0, 0, 1, 1], [], []>} : vector<128x256xbf16>, vector<256x128xbf16>, vector<128x128xf32> -> vector<128x128xf32>
    %c0_9 = arith.constant 0 : index
    %c0_10 = arith.constant 0 : index
    %12 = vector.load %arg5[%c0_9, %c0_10] : memref<1x128xf32, #tpu.memory_space<vmem>>, vector<1x128xf32>
    %13 = vector.broadcast %12 : vector<1x128xf32> to vector<128x128xf32>
    %14 = arith.addf %11, %13 : vector<128x128xf32>
    %cst_11 = arith.constant 0.000000e+00 : f32
    %15 = vector.broadcast %cst_11 : f32 to vector<128x128xf32>
    %16 = arith.maximumf %14, %15 : vector<128x128xf32>
    %17 = arith.truncf %16 : vector<128x128xf32> to vector<128x128xbf16>
    %c0_12 = arith.constant 0 : index
    %c0_13 = arith.constant 0 : index
    %18 = vector.load %arg6[%c0_12, %c0_13] : memref<128x128xbf16, #tpu.memory_space<vmem>>, vector<128x128xbf16>
    %cst_14 = arith.constant dense<0.000000e+00> : vector<128x128xf32>
    %19 = tpu.matmul %17, %18, %cst_14 {dimension_numbers = #tpu.dot_dimension_numbers<[1], [0], [0], [1], [0, 0, 1, 1], [], []>} : vector<128x128xbf16>, vector<128x128xbf16>, vector<128x128xf32> -> vector<128x128xf32>
    %c0_15 = arith.constant 0 : index
    %c0_16 = arith.constant 0 : index
    %20 = vector.load %arg7[%c0_15, %c0_16] : memref<1x128xf32, #tpu.memory_space<vmem>>, vector<1x128xf32>
    %21 = vector.broadcast %20 : vector<1x128xf32> to vector<128x128xf32>
    %22 = arith.addf %19, %21 : vector<128x128xf32>
    %cst_17 = arith.constant 0.000000e+00 : f32
    %23 = vector.broadcast %cst_17 : f32 to vector<128x128xf32>
    %24 = arith.maximumf %22, %23 : vector<128x128xf32>
    %25 = arith.truncf %24 : vector<128x128xf32> to vector<128x128xbf16>
    %c0_18 = arith.constant 0 : index
    %c0_19 = arith.constant 0 : index
    %26 = vector.load %arg8[%c0_18, %c0_19] : memref<128x128xbf16, #tpu.memory_space<vmem>>, vector<128x128xbf16>
    %cst_20 = arith.constant dense<0.000000e+00> : vector<128x128xf32>
    %27 = tpu.matmul %25, %26, %cst_20 {dimension_numbers = #tpu.dot_dimension_numbers<[1], [0], [0], [1], [0, 0, 1, 1], [], []>} : vector<128x128xbf16>, vector<128x128xbf16>, vector<128x128xf32> -> vector<128x128xf32>
    %c0_21 = arith.constant 0 : index
    %c0_22 = arith.constant 0 : index
    %28 = vector.load %arg9[%c0_21, %c0_22] : memref<1x128xf32, #tpu.memory_space<vmem>>, vector<1x128xf32>
    %29 = vector.broadcast %28 : vector<1x128xf32> to vector<128x128xf32>
    %30 = arith.addf %27, %29 : vector<128x128xf32>
    %31 = vector.extract_strided_slice %30 {offsets = [0, 0], sizes = [128, 8], strides = [1, 1]} : vector<128x128xf32> to vector<128x8xf32>
    %c0_23 = arith.constant 0 : index
    %c0_24 = arith.constant 0 : index
    %32 = vector.load %arg19[%c0_23, %c0_24] : memref<128x8xf32, #tpu.memory_space<vmem>>, vector<128x8xf32>
    tpu.vector_store %arg19[%c0_23, %c0_24], %31 {strides = array<i32>} : memref<128x8xf32, #tpu.memory_space<vmem>>, vector<128x8xf32>,
    %33 = arith.truncf %30 : vector<128x128xf32> to vector<128x128xbf16>
    %c0_25 = arith.constant 0 : index
    %c0_26 = arith.constant 0 : index
    %34 = vector.load %arg10[%c0_25, %c0_26] : memref<128x128xbf16, #tpu.memory_space<vmem>>, vector<128x128xbf16>
    %cst_27 = arith.constant dense<0.000000e+00> : vector<128x128xf32>
    %35 = tpu.matmul %33, %34, %cst_27 {dimension_numbers = #tpu.dot_dimension_numbers<[1], [0], [0], [1], [0, 0, 1, 1], [], []>} : vector<128x128xbf16>, vector<128x128xbf16>, vector<128x128xf32> -> vector<128x128xf32>
    %c0_28 = arith.constant 0 : index
    %c0_29 = arith.constant 0 : index
    %36 = vector.load %arg11[%c0_28, %c0_29] : memref<1x128xf32, #tpu.memory_space<vmem>>, vector<1x128xf32>
    %37 = vector.broadcast %36 : vector<1x128xf32> to vector<128x128xf32>
    %38 = arith.addf %35, %37 : vector<128x128xf32>
    %cst_30 = arith.constant 0.000000e+00 : f32
    %39 = vector.broadcast %cst_30 : f32 to vector<128x128xf32>
    %40 = arith.maximumf %38, %39 : vector<128x128xf32>
    %41 = arith.truncf %40 : vector<128x128xf32> to vector<128x128xbf16>
    %c0_31 = arith.constant 0 : index
    %c0_32 = arith.constant 0 : index
    %42 = vector.load %arg12[%c0_31, %c0_32] : memref<128x128xbf16, #tpu.memory_space<vmem>>, vector<128x128xbf16>
    %cst_33 = arith.constant dense<0.000000e+00> : vector<128x128xf32>
    %43 = tpu.matmul %41, %42, %cst_33 {dimension_numbers = #tpu.dot_dimension_numbers<[1], [0], [0], [1], [0, 0, 1, 1], [], []>} : vector<128x128xbf16>, vector<128x128xbf16>, vector<128x128xf32> -> vector<128x128xf32>
    %c0_34 = arith.constant 0 : index
    %c0_35 = arith.constant 0 : index
    %44 = vector.load %arg13[%c0_34, %c0_35] : memref<1x128xf32, #tpu.memory_space<vmem>>, vector<1x128xf32>
    %45 = vector.broadcast %44 : vector<1x128xf32> to vector<128x128xf32>
    %46 = arith.addf %43, %45 : vector<128x128xf32>
    %cst_36 = arith.constant 0.000000e+00 : f32
    %47 = vector.broadcast %cst_36 : f32 to vector<128x128xf32>
    %48 = arith.maximumf %46, %47 : vector<128x128xf32>
    %49 = arith.truncf %48 : vector<128x128xf32> to vector<128x128xbf16>
    %c0_37 = arith.constant 0 : index
    %c0_38 = arith.constant 0 : index
    %50 = vector.load %arg14[%c0_37, %c0_38] : memref<128x256xbf16, #tpu.memory_space<vmem>>, vector<128x256xbf16>
    %cst_39 = arith.constant dense<0.000000e+00> : vector<128x256xf32>
    %51 = tpu.matmul %49, %50, %cst_39 {dimension_numbers = #tpu.dot_dimension_numbers<[1], [0], [0], [1], [0, 0, 1, 1], [], []>} : vector<128x128xbf16>, vector<128x256xbf16>, vector<128x256xf32> -> vector<128x256xf32>
    %c0_40 = arith.constant 0 : index
    %c0_41 = arith.constant 0 : index
    %52 = vector.load %arg15[%c0_40, %c0_41] : memref<1x256xf32, #tpu.memory_space<vmem>>, vector<1x256xf32>
    %53 = vector.broadcast %52 : vector<1x256xf32> to vector<128x256xf32>
    %54 = arith.addf %51, %53 : vector<128x256xf32>
    %cst_42 = arith.constant 0.000000e+00 : f32
    %55 = vector.broadcast %cst_42 : f32 to vector<128x256xf32>
    %56 = arith.maximumf %54, %55 : vector<128x256xf32>
    %57 = arith.truncf %56 : vector<128x256xf32> to vector<128x256xbf16>
    %c0_43 = arith.constant 0 : index
    %c0_44 = arith.constant 0 : index
    %58 = vector.load %arg16[%c0_43, %c0_44] : memref<256x64xbf16, #tpu.memory_space<vmem>>, vector<256x64xbf16>
    %cst_45 = arith.constant dense<0.000000e+00> : vector<128x64xf32>
    %59 = tpu.matmul %57, %58, %cst_45 {dimension_numbers = #tpu.dot_dimension_numbers<[1], [0], [0], [1], [0, 0, 1, 1], [], []>} : vector<128x256xbf16>, vector<256x64xbf16>, vector<128x64xf32> -> vector<128x64xf32>
    %c0_46 = arith.constant 0 : index
    %c0_47 = arith.constant 0 : index
    %60 = vector.load %arg17[%c0_46, %c0_47] : memref<1x64xf32, #tpu.memory_space<vmem>>, vector<1x64xf32>
    %61 = vector.broadcast %60 : vector<1x64xf32> to vector<128x64xf32>
    %62 = arith.addf %59, %61 : vector<128x64xf32>
    %c0_48 = arith.constant 0 : index
    %c0_49 = arith.constant 0 : index
    %63 = vector.load %arg18[%c0_48, %c0_49] : memref<128x64xf32, #tpu.memory_space<vmem>>, vector<128x64xf32>
    tpu.vector_store %arg18[%c0_48, %c0_49], %62 {strides = array<i32>} : memref<128x64xf32, #tpu.memory_space<vmem>>, vector<128x64xf32>,
    return
  }
  func.func @transform_0(%arg0: i32) -> (i32, i32) {
    %c0_i32 = arith.constant 0 : i32
    %c0_i32_0 = arith.constant 0 : i32
    return %arg0, %c0_i32 : i32, i32
  }
  func.func @transform_1(%arg0: i32) -> (i32, i32) {
    %c0_i32 = arith.constant 0 : i32
    %c0_i32_0 = arith.constant 0 : i32
    %c0_i32_1 = arith.constant 0 : i32
    return %c0_i32, %c0_i32_0 : i32, i32
  }
  func.func @transform_2(%arg0: i32) -> (i32, i32) {
    %c0_i32 = arith.constant 0 : i32
    %c0_i32_0 = arith.constant 0 : i32
    %c0_i32_1 = arith.constant 0 : i32
    return %c0_i32, %c0_i32_0 : i32, i32
  }
  func.func @transform_3(%arg0: i32) -> (i32, i32) {
    %c0_i32 = arith.constant 0 : i32
    %c0_i32_0 = arith.constant 0 : i32
    %c0_i32_1 = arith.constant 0 : i32
    return %c0_i32, %c0_i32_0 : i32, i32
  }
  func.func @transform_4(%arg0: i32) -> (i32, i32) {
    %c0_i32 = arith.constant 0 : i32
    %c0_i32_0 = arith.constant 0 : i32
    %c0_i32_1 = arith.constant 0 : i32
    return %c0_i32, %c0_i32_0 : i32, i32
  }
  func.func @transform_5(%arg0: i32) -> (i32, i32) {
    %c0_i32 = arith.constant 0 : i32
    %c0_i32_0 = arith.constant 0 : i32
    %c0_i32_1 = arith.constant 0 : i32
    return %c0_i32, %c0_i32_0 : i32, i32
  }
  func.func @transform_6(%arg0: i32) -> (i32, i32) {
    %c0_i32 = arith.constant 0 : i32
    %c0_i32_0 = arith.constant 0 : i32
    %c0_i32_1 = arith.constant 0 : i32
    return %c0_i32, %c0_i32_0 : i32, i32
  }
  func.func @transform_7(%arg0: i32) -> (i32, i32) {
    %c0_i32 = arith.constant 0 : i32
    %c0_i32_0 = arith.constant 0 : i32
    %c0_i32_1 = arith.constant 0 : i32
    return %c0_i32, %c0_i32_0 : i32, i32
  }
  func.func @transform_8(%arg0: i32) -> (i32, i32) {
    %c0_i32 = arith.constant 0 : i32
    %c0_i32_0 = arith.constant 0 : i32
    %c0_i32_1 = arith.constant 0 : i32
    return %c0_i32, %c0_i32_0 : i32, i32
  }
  func.func @transform_9(%arg0: i32) -> (i32, i32) {
    %c0_i32 = arith.constant 0 : i32
    %c0_i32_0 = arith.constant 0 : i32
    %c0_i32_1 = arith.constant 0 : i32
    return %c0_i32, %c0_i32_0 : i32, i32
  }
  func.func @transform_10(%arg0: i32) -> (i32, i32) {
    %c0_i32 = arith.constant 0 : i32
    %c0_i32_0 = arith.constant 0 : i32
    %c0_i32_1 = arith.constant 0 : i32
    return %c0_i32, %c0_i32_0 : i32, i32
  }
  func.func @transform_11(%arg0: i32) -> (i32, i32) {
    %c0_i32 = arith.constant 0 : i32
    %c0_i32_0 = arith.constant 0 : i32
    %c0_i32_1 = arith.constant 0 : i32
    return %c0_i32, %c0_i32_0 : i32, i32
  }
  func.func @transform_12(%arg0: i32) -> (i32, i32) {
    %c0_i32 = arith.constant 0 : i32
    %c0_i32_0 = arith.constant 0 : i32
    %c0_i32_1 = arith.constant 0 : i32
    return %c0_i32, %c0_i32_0 : i32, i32
  }
  func.func @transform_13(%arg0: i32) -> (i32, i32) {
    %c0_i32 = arith.constant 0 : i32
    %c0_i32_0 = arith.constant 0 : i32
    %c0_i32_1 = arith.constant 0 : i32
    return %c0_i32, %c0_i32_0 : i32, i32
  }
  func.func @transform_14(%arg0: i32) -> (i32, i32) {
    %c0_i32 = arith.constant 0 : i32
    %c0_i32_0 = arith.constant 0 : i32
    %c0_i32_1 = arith.constant 0 : i32
    return %c0_i32, %c0_i32_0 : i32, i32
  }
  func.func @transform_15(%arg0: i32) -> (i32, i32) {
    %c0_i32 = arith.constant 0 : i32
    %c0_i32_0 = arith.constant 0 : i32
    %c0_i32_1 = arith.constant 0 : i32
    return %c0_i32, %c0_i32_0 : i32, i32
  }
  func.func @transform_16(%arg0: i32) -> (i32, i32) {
    %c0_i32 = arith.constant 0 : i32
    %c0_i32_0 = arith.constant 0 : i32
    %c0_i32_1 = arith.constant 0 : i32
    return %c0_i32, %c0_i32_0 : i32, i32
  }
  func.func @transform_17(%arg0: i32) -> (i32, i32) {
    %c0_i32 = arith.constant 0 : i32
    %c0_i32_0 = arith.constant 0 : i32
    return %arg0, %c0_i32 : i32, i32
  }
  func.func @transform_18(%arg0: i32) -> (i32, i32) {
    %c0_i32 = arith.constant 0 : i32
    %c0_i32_0 = arith.constant 0 : i32
    return %arg0, %c0_i32 : i32, i32
  }
}

</mosaic_0001>

<llo_original>
// kernel: text_autoencoder_forward.1
$region0: #{text_autoencoder_forward.1}
  #allocation0 [shape = 'u32[]', space=smem, size = 0x4, offset = 0x4, fixed_abs, tag = 'smem constant byte address 0x4 - core index']
  #allocation1 [shape = 'u32[72,128]{1,0:T(1,128)}', space=vmem, size = 0x9000, scoped, tag = 'internal scratch']
  %s0 = inlined_call_operand.vmem [shape: f32[256,64], index: 0, kind: input, shape index: {}]
  %s1 = inlined_call_operand.vmem [shape: bf16[64,256], index: 1, kind: input, shape index: {}]
  %s2 = inlined_call_operand.hbm [shape: f32[1,256], index: 2, kind: input, shape index: {}]
  %s3 = inlined_call_operand.vmem [shape: bf16[256,128], index: 3, kind: input, shape index: {}]
  %s4 = inlined_call_operand.hbm [shape: f32[1,128], index: 4, kind: input, shape index: {}]
  %s5 = inlined_call_operand.vmem [shape: bf16[128,128], index: 5, kind: input, shape index: {}]
  %s6 = inlined_call_operand.vmem [shape: f32[1,128], index: 6, kind: input, shape index: {}]
  %s7 = inlined_call_operand.vmem [shape: bf16[128,128], index: 7, kind: input, shape index: {}]
  %s8 = inlined_call_operand.vmem [shape: f32[1,128], index: 8, kind: input, shape index: {}]
  %s9 = inlined_call_operand.hbm [shape: bf16[128,128], index: 9, kind: input, shape index: {}]
  %s10 = inlined_call_operand.hbm [shape: f32[1,128], index: 10, kind: input, shape index: {}]
  %s11 = inlined_call_operand.hbm [shape: bf16[128,128], index: 11, kind: input, shape index: {}]
  %s12 = inlined_call_operand.hbm [shape: f32[1,128], index: 12, kind: input, shape index: {}]
  %s13 = inlined_call_operand.vmem [shape: bf16[128,256], index: 13, kind: input, shape index: {}]
  %s14 = inlined_call_operand.hbm [shape: f32[1,256], index: 14, kind: input, shape index: {}]
  %s15 = inlined_call_operand.vmem [shape: bf16[256,64], index: 15, kind: input, shape index: {}]
  %s16 = inlined_call_operand.hbm [shape: f32[1,64], index: 16, kind: input, shape index: {}]
  %s17 = inlined_call_operand.vmem [shape: f32[256,64], index: 17, kind: output, shape index: {0}]
  %s18 = inlined_call_operand.vmem [shape: f32[256,8], index: 18, kind: output, shape index: {1}]
  %19 = xla_tuple %s17, %s18
  %s20 = sld [smem:[#allocation0]]
  $region141: #{text_autoencoder_forward.1} parent=0
    _
  %s22 = ssub.s32 1, %s20
  %s23 = scalar_select 0, %s22, %s20
  $region1: #{text_autoencoder_forward.1} parent=0
    #allocation2 [shape = 'u8[1024]{0}', space=vmem, size = 0x400, scoped, tag = 'input window, operand 2, single buffered']
    #allocation3 [shape = 's32[2]{0}', space=sflag, size = 0x8, scoped, tag = 'scoped memory for text_autoencoder_forward.1']
    #allocation4 [shape = 'u8[512]{0}', space=vmem, size = 0x400, scoped, tag = 'input window, operand 4, single buffered']
    #allocation5 [shape = 's32[1]{0}', space=sflag, size = 0x4, scoped, tag = 'scoped memory for text_autoencoder_forward.1']
    #allocation6 [shape = 'u8[32768]{0}', space=vmem, size = 0x8000, scoped, tag = 'input window, operand 9, single buffered']
    #allocation7 [shape = 'u8[512]{0}', space=vmem, size = 0x400, scoped, tag = 'input window, operand 10, single buffered']
    #allocation8 [shape = 's32[1]{0}', space=sflag, size = 0x4, scoped, tag = 'scoped memory for text_autoencoder_forward.1']
    #allocation9 [shape = 'u8[32768]{0}', space=vmem, size = 0x8000, scoped, tag = 'input window, operand 11, single buffered']
    #allocation10 [shape = 'u8[512]{0}', space=vmem, size = 0x400, scoped, tag = 'input window, operand 12, single buffered']
    #allocation11 [shape = 's32[1]{0}', space=sflag, size = 0x4, scoped, tag = 'scoped memory for text_autoencoder_forward.1']
    #allocation12 [shape = 'u8[1024]{0}', space=vmem, size = 0x400, scoped, tag = 'input window, operand 14, single buffered']
    #allocation13 [shape = 'u8[512]{0}', space=vmem, size = 0x400, scoped, tag = 'input window, operand 16, single buffered']
    #allocation14 [shape = 's32[1]{0}', space=sflag, size = 0x4, scoped, tag = 'scoped memory for text_autoencoder_forward.1']
    %24 = vsyncpa [#allocation3], 0
    %25 = vsyncpa [#allocation5], 0
    %26 = vsyncpa [#allocation8], 0
    %27 = vsyncpa [#allocation11], 0
    %28 = vsyncpa [#allocation14], 0
    loop: start=0, step=1, limit=4
    $region2: #{text_autoencoder_forward.1} parent=1 // loop_pre_header
      _
    $region3: #{text_autoencoder_forward.1} parent=1 // loop_header
      %s30 = sphi 0, %s34
      %p31 = scmp.ge.s32.totalorder %s30, 4
      %s40 = sphi 0, %s42
      %s43 = sphi 0, %s40
      %s44 = sphi 0, %s43
      %s60 = sphi 0, %s44
      %s64 = sphi 0, %s64
      %s66 = sphi 0, %s64
      %s67 = sphi 0, %s66
      %s81 = sphi 0, %s67
      %s85 = sphi 0, %s85
      %s87 = sphi 0, %s85
      %s88 = sphi 0, %s87
      %s102 = sphi 0, %s88
      %s106 = sphi 0, %s106
      %s108 = sphi 0, %s106
      %s109 = sphi 0, %s108
      %s123 = sphi 0, %s109
      %s127 = sphi 0, %s127
      %s129 = sphi 0, %s127
      %s130 = sphi 0, %s129
      %s144 = sphi 0, %s130
      %s148 = sphi 0, %s148
      %s150 = sphi 0, %s148
      %s151 = sphi 0, %s150
      %s165 = sphi 0, %s151
      %s169 = sphi 0, %s169
      %s171 = sphi 0, %s169
      %s172 = sphi 0, %s171
      %s186 = sphi 0, %s172
      %s190 = sphi 0, %s190
      %s192 = sphi 0, %s190
      %s193 = sphi 0, %s192
      %s207 = sphi 0, %s193
      %s211 = sphi 0, %s211
      %s213 = sphi 0, %s211
      %s214 = sphi 0, %s213
      %s228 = sphi 0, %s214
      %s232 = sphi 0, %s232
      %s234 = sphi 0, %s232
      %s235 = sphi 0, %s234
      %s249 = sphi 0, %s235
      %s253 = sphi 0, %s253
      %s255 = sphi 0, %s253
      %s256 = sphi 0, %s255
      %s270 = sphi 0, %s256
      %s274 = sphi 0, %s274
      %s276 = sphi 0, %s274
      %s277 = sphi 0, %s276
      %s291 = sphi 0, %s277
      %s295 = sphi 0, %s295
      %s297 = sphi 0, %s295
      %s298 = sphi 0, %s297
      %s312 = sphi 0, %s298
      %s316 = sphi 0, %s316
      %s318 = sphi 0, %s316
      %s319 = sphi 0, %s318
      %s333 = sphi 0, %s319
      %s337 = sphi 0, %s337
      %s339 = sphi 0, %s337
      %s340 = sphi 0, %s339
      %s354 = sphi 0, %s340
      %s358 = sphi 0, %s358
      %s360 = sphi 0, %s358
      %s361 = sphi 0, %s360
      %s375 = sphi 0, %s361
      %s379 = sphi 0, %s379
      %s381 = sphi 0, %s379
      %s382 = sphi 0, %s381
      %s396 = sphi 0, %s382
      %s402 = sphi 0, %s404
      %s405 = sphi 0, %s402
      %s406 = sphi 0, %s405
      %s422 = sphi 0, %s406
      %s428 = sphi 0, %s430
      %s431 = sphi 0, %s428
      %s432 = sphi 0, %s431
      %s448 = sphi 0, %s432
    $region4: #{text_autoencoder_forward.1} parent=1 // loop_header_branch
      %33 = sbr.rel (%p31) target = $region8
    $region5: #{text_autoencoder_forward.1} parent=1 // loop_body
      %s35 = ssub.s32 %s30, 1
      %s36 = ssub.s32 %s30, 2
      %s37 = sadd.s32 %s30, 1
      %s38 = ssub.s32 %s30, %s37
      %p39 = scmp.eq.s32.totalorder %s38, 0
      %s41 = sadd.s32 %s40, 1
      %s42 = scalar_select %p39, %s40, %s41
      %p45 = pneg %p39
      %p46 = scmp.eq.s32.totalorder %s30, 1
      %p47 = por %p45, %p46
      %p48 = scmp.ne.s32.totalorder %s40, %s43
      %p49 = scmp.eq.s32.totalorder %s30, 0
      %p50 = por %p48, %p49
      %p51 = scmp.ne.s32.totalorder %s40, %s43
      %p52 = scmp.eq.s32.totalorder %s35, 1
      %p53 = por %p51, %p52
      %p54 = scmp.ne.s32.totalorder %s43, %s44
      %p55 = scmp.eq.s32.totalorder %s35, 0
      %p56 = por %p54, %p55
      %p57 = scmp.ne.s32.totalorder %s43, %s44
      %p58 = scmp.eq.s32.totalorder %s36, 1
      %p59 = por %p57, %p58
      %p61 = scmp.ne.s32.totalorder %s44, %s60
      %p62 = scmp.eq.s32.totalorder %s36, 0
      %p63 = por %p61, %p62
      %s65 = sadd.s32 %s64, 1
      %p68 = scmp.eq.s32.totalorder %s30, 1
      %p69 = scmp.ne.s32.totalorder %s64, %s66
      %p70 = scmp.eq.s32.totalorder %s30, 0
      %p71 = por %p69, %p70
      %p72 = scmp.ne.s32.totalorder %s64, %s66
      %p73 = scmp.eq.s32.totalorder %s35, 1
      %p74 = por %p72, %p73
      %p75 = scmp.ne.s32.totalorder %s66, %s67
      %p76 = scmp.eq.s32.totalorder %s35, 0
      %p77 = por %p75, %p76
      %p78 = scmp.ne.s32.totalorder %s66, %s67
      %p79 = scmp.eq.s32.totalorder %s36, 1
      %p80 = por %p78, %p79
      %p82 = scmp.ne.s32.totalorder %s67, %s81
      %p83 = scmp.eq.s32.totalorder %s36, 0
      %p84 = por %p82, %p83
      %s86 = sadd.s32 %s85, 1
      %p89 = scmp.eq.s32.totalorder %s30, 1
      %p90 = scmp.ne.s32.totalorder %s85, %s87
      %p91 = scmp.eq.s32.totalorder %s30, 0
      %p92 = por %p90, %p91
      %p93 = scmp.ne.s32.totalorder %s85, %s87
      %p94 = scmp.eq.s32.totalorder %s35, 1
      %p95 = por %p93, %p94
      %p96 = scmp.ne.s32.totalorder %s87, %s88
      %p97 = scmp.eq.s32.totalorder %s35, 0
      %p98 = por %p96, %p97
      %p99 = scmp.ne.s32.totalorder %s87, %s88
      %p100 = scmp.eq.s32.totalorder %s36, 1
      %p101 = por %p99, %p100
      %p103 = scmp.ne.s32.totalorder %s88, %s102
      %p104 = scmp.eq.s32.totalorder %s36, 0
      %p105 = por %p103, %p104
      %s107 = sadd.s32 %s106, 1
      %p110 = scmp.eq.s32.totalorder %s30, 1
      %p111 = scmp.ne.s32.totalorder %s106, %s108
      %p112 = scmp.eq.s32.totalorder %s30, 0
      %p113 = por %p111, %p112
      %p114 = scmp.ne.s32.totalorder %s106, %s108
      %p115 = scmp.eq.s32.totalorder %s35, 1
      %p116 = por %p114, %p115
      %p117 = scmp.ne.s32.totalorder %s108, %s109
      %p118 = scmp.eq.s32.totalorder %s35, 0
      %p119 = por %p117, %p118
      %p120 = scmp.ne.s32.totalorder %s108, %s109
      %p121 = scmp.eq.s32.totalorder %s36, 1
      %p122 = por %p120, %p121
      %p124 = scmp.ne.s32.totalorder %s109, %s123
      %p125 = scmp.eq.s32.totalorder %s36, 0
      %p126 = por %p124, %p125
      %s128 = sadd.s32 %s127, 1
      %p131 = scmp.eq.s32.totalorder %s30, 1
      %p132 = scmp.ne.s32.totalorder %s127, %s129
      %p133 = scmp.eq.s32.totalorder %s30, 0
      %p134 = por %p132, %p133
      %p135 = scmp.ne.s32.totalorder %s127, %s129
      %p136 = scmp.eq.s32.totalorder %s35, 1
      %p137 = por %p135, %p136
      %p138 = scmp.ne.s32.totalorder %s129, %s130
      %p139 = scmp.eq.s32.totalorder %s35, 0
      %p140 = por %p138, %p139
      %p141 = scmp.ne.s32.totalorder %s129, %s130
      %p142 = scmp.eq.s32.totalorder %s36, 1
      %p143 = por %p141, %p142
      %p145 = scmp.ne.s32.totalorder %s130, %s144
      %p146 = scmp.eq.s32.totalorder %s36, 0
      %p147 = por %p145, %p146
      %s149 = sadd.s32 %s148, 1
      %p152 = scmp.eq.s32.totalorder %s30, 1
      %p153 = scmp.ne.s32.totalorder %s148, %s150
      %p154 = scmp.eq.s32.totalorder %s30, 0
      %p155 = por %p153, %p154
      %p156 = scmp.ne.s32.totalorder %s148, %s150
      %p157 = scmp.eq.s32.totalorder %s35, 1
      %p158 = por %p156, %p157
      %p159 = scmp.ne.s32.totalorder %s150, %s151
      %p160 = scmp.eq.s32.totalorder %s35, 0
      %p161 = por %p159, %p160
      %p162 = scmp.ne.s32.totalorder %s150, %s151
      %p163 = scmp.eq.s32.totalorder %s36, 1
      %p164 = por %p162, %p163
      %p166 = scmp.ne.s32.totalorder %s151, %s165
      %p167 = scmp.eq.s32.totalorder %s36, 0
      %p168 = por %p166, %p167
      %s170 = sadd.s32 %s169, 1
      %p173 = scmp.eq.s32.totalorder %s30, 1
      %p174 = scmp.ne.s32.totalorder %s169, %s171
      %p175 = scmp.eq.s32.totalorder %s30, 0
      %p176 = por %p174, %p175
      %p177 = scmp.ne.s32.totalorder %s169, %s171
      %p178 = scmp.eq.s32.totalorder %s35, 1
      %p179 = por %p177, %p178
      %p180 = scmp.ne.s32.totalorder %s171, %s172
      %p181 = scmp.eq.s32.totalorder %s35, 0
      %p182 = por %p180, %p181
      %p183 = scmp.ne.s32.totalorder %s171, %s172
      %p184 = scmp.eq.s32.totalorder %s36, 1
      %p185 = por %p183, %p184
      %p187 = scmp.ne.s32.totalorder %s172, %s186
      %p188 = scmp.eq.s32.totalorder %s36, 0
      %p189 = por %p187, %p188
      %s191 = sadd.s32 %s190, 1
      %p194 = scmp.eq.s32.totalorder %s30, 1
      %p195 = scmp.ne.s32.totalorder %s190, %s192
      %p196 = scmp.eq.s32.totalorder %s30, 0
      %p197 = por %p195, %p196
      %p198 = scmp.ne.s32.totalorder %s190, %s192
      %p199 = scmp.eq.s32.totalorder %s35, 1
      %p200 = por %p198, %p199
      %p201 = scmp.ne.s32.totalorder %s192, %s193
      %p202 = scmp.eq.s32.totalorder %s35, 0
      %p203 = por %p201, %p202
      %p204 = scmp.ne.s32.totalorder %s192, %s193
      %p205 = scmp.eq.s32.totalorder %s36, 1
      %p206 = por %p204, %p205
      %p208 = scmp.ne.s32.totalorder %s193, %s207
      %p209 = scmp.eq.s32.totalorder %s36, 0
      %p210 = por %p208, %p209
      %s212 = sadd.s32 %s211, 1
      %p215 = scmp.eq.s32.totalorder %s30, 1
      %p216 = scmp.ne.s32.totalorder %s211, %s213
      %p217 = scmp.eq.s32.totalorder %s30, 0
      %p218 = por %p216, %p217
      %p219 = scmp.ne.s32.totalorder %s211, %s213
      %p220 = scmp.eq.s32.totalorder %s35, 1
      %p221 = por %p219, %p220
      %p222 = scmp.ne.s32.totalorder %s213, %s214
      %p223 = scmp.eq.s32.totalorder %s35, 0
      %p224 = por %p222, %p223
      %p225 = scmp.ne.s32.totalorder %s213, %s214
      %p226 = scmp.eq.s32.totalorder %s36, 1
      %p227 = por %p225, %p226
      %p229 = scmp.ne.s32.totalorder %s214, %s228
      %p230 = scmp.eq.s32.totalorder %s36, 0
      %p231 = por %p229, %p230
      %s233 = sadd.s32 %s232, 1
      %p236 = scmp.eq.s32.totalorder %s30, 1
      %p237 = scmp.ne.s32.totalorder %s232, %s234
      %p238 = scmp.eq.s32.totalorder %s30, 0
      %p239 = por %p237, %p238
      %p240 = scmp.ne.s32.totalorder %s232, %s234
      %p241 = scmp.eq.s32.totalorder %s35, 1
      %p242 = por %p240, %p241
      %p243 = scmp.ne.s32.totalorder %s234, %s235
      %p244 = scmp.eq.s32.totalorder %s35, 0
      %p245 = por %p243, %p244
      %p246 = scmp.ne.s32.totalorder %s234, %s235
      %p247 = scmp.eq.s32.totalorder %s36, 1
      %p248 = por %p246, %p247
      %p250 = scmp.ne.s32.totalorder %s235, %s249
      %p251 = scmp.eq.s32.totalorder %s36, 0
      %p252 = por %p250, %p251
      %s254 = sadd.s32 %s253, 1
      %p257 = scmp.eq.s32.totalorder %s30, 1
      %p258 = scmp.ne.s32.totalorder %s253, %s255
      %p259 = scmp.eq.s32.totalorder %s30, 0
      %p260 = por %p258, %p259
      %p261 = scmp.ne.s32.totalorder %s253, %s255
      %p262 = scmp.eq.s32.totalorder %s35, 1
      %p263 = por %p261, %p262
      %p264 = scmp.ne.s32.totalorder %s255, %s256
      %p265 = scmp.eq.s32.totalorder %s35, 0
      %p266 = por %p264, %p265
      %p267 = scmp.ne.s32.totalorder %s255, %s256
      %p268 = scmp.eq.s32.totalorder %s36, 1
      %p269 = por %p267, %p268
      %p271 = scmp.ne.s32.totalorder %s256, %s270
      %p272 = scmp.eq.s32.totalorder %s36, 0
      %p273 = por %p271, %p272
      %s275 = sadd.s32 %s274, 1
      %p278 = scmp.eq.s32.totalorder %s30, 1
      %p279 = scmp.ne.s32.totalorder %s274, %s276
      %p280 = scmp.eq.s32.totalorder %s30, 0
      %p281 = por %p279, %p280
      %p282 = scmp.ne.s32.totalorder %s274, %s276
      %p283 = scmp.eq.s32.totalorder %s35, 1
      %p284 = por %p282, %p283
      %p285 = scmp.ne.s32.totalorder %s276, %s277
      %p286 = scmp.eq.s32.totalorder %s35, 0
      %p287 = por %p285, %p286
      %p288 = scmp.ne.s32.totalorder %s276, %s277
      %p289 = scmp.eq.s32.totalorder %s36, 1
      %p290 = por %p288, %p289
      %p292 = scmp.ne.s32.totalorder %s277, %s291
      %p293 = scmp.eq.s32.totalorder %s36, 0
      %p294 = por %p292, %p293
      %s296 = sadd.s32 %s295, 1
      %p299 = scmp.eq.s32.totalorder %s30, 1
      %p300 = scmp.ne.s32.totalorder %s295, %s297
      %p301 = scmp.eq.s32.totalorder %s30, 0
      %p302 = por %p300, %p301
      %p303 = scmp.ne.s32.totalorder %s295, %s297
      %p304 = scmp.eq.s32.totalorder %s35, 1
      %p305 = por %p303, %p304
      %p306 = scmp.ne.s32.totalorder %s297, %s298
      %p307 = scmp.eq.s32.totalorder %s35, 0
      %p308 = por %p306, %p307
      %p309 = scmp.ne.s32.totalorder %s297, %s298
      %p310 = scmp.eq.s32.totalorder %s36, 1
      %p311 = por %p309, %p310
      %p313 = scmp.ne.s32.totalorder %s298, %s312
      %p314 = scmp.eq.s32.totalorder %s36, 0
      %p315 = por %p313, %p314
      %s317 = sadd.s32 %s316, 1
      %p320 = scmp.eq.s32.totalorder %s30, 1
      %p321 = scmp.ne.s32.totalorder %s316, %s318
      %p322 = scmp.eq.s32.totalorder %s30, 0
      %p323 = por %p321, %p322
      %p324 = scmp.ne.s32.totalorder %s316, %s318
      %p325 = scmp.eq.s32.totalorder %s35, 1
      %p326 = por %p324, %p325
      %p327 = scmp.ne.s32.totalorder %s318, %s319
      %p328 = scmp.eq.s32.totalorder %s35, 0
      %p329 = por %p327, %p328
      %p330 = scmp.ne.s32.totalorder %s318, %s319
      %p331 = scmp.eq.s32.totalorder %s36, 1
      %p332 = por %p330, %p331
      %p334 = scmp.ne.s32.totalorder %s319, %s333
      %p335 = scmp.eq.s32.totalorder %s36, 0
      %p336 = por %p334, %p335
      %s338 = sadd.s32 %s337, 1
      %p341 = scmp.eq.s32.totalorder %s30, 1
      %p342 = scmp.ne.s32.totalorder %s337, %s339
      %p343 = scmp.eq.s32.totalorder %s30, 0
      %p344 = por %p342, %p343
      %p345 = scmp.ne.s32.totalorder %s337, %s339
      %p346 = scmp.eq.s32.totalorder %s35, 1
      %p347 = por %p345, %p346
      %p348 = scmp.ne.s32.totalorder %s339, %s340
      %p349 = scmp.eq.s32.totalorder %s35, 0
      %p350 = por %p348, %p349
      %p351 = scmp.ne.s32.totalorder %s339, %s340
      %p352 = scmp.eq.s32.totalorder %s36, 1
      %p353 = por %p351, %p352
      %p355 = scmp.ne.s32.totalorder %s340, %s354
      %p356 = scmp.eq.s32.totalorder %s36, 0
      %p357 = por %p355, %p356
      %s359 = sadd.s32 %s358, 1
      %p362 = scmp.eq.s32.totalorder %s30, 1
      %p363 = scmp.ne.s32.totalorder %s358, %s360
      %p364 = scmp.eq.s32.totalorder %s30, 0
      %p365 = por %p363, %p364
      %p366 = scmp.ne.s32.totalorder %s358, %s360
      %p367 = scmp.eq.s32.totalorder %s35, 1
      %p368 = por %p366, %p367
      %p369 = scmp.ne.s32.totalorder %s360, %s361
      %p370 = scmp.eq.s32.totalorder %s35, 0
      %p371 = por %p369, %p370
      %p372 = scmp.ne.s32.totalorder %s360, %s361
      %p373 = scmp.eq.s32.totalorder %s36, 1
      %p374 = por %p372, %p373
      %p376 = scmp.ne.s32.totalorder %s361, %s375
      %p377 = scmp.eq.s32.totalorder %s36, 0
      %p378 = por %p376, %p377
      %s380 = sadd.s32 %s379, 1
      %p383 = scmp.eq.s32.totalorder %s30, 1
      %p384 = scmp.ne.s32.totalorder %s379, %s381
      %p385 = scmp.eq.s32.totalorder %s30, 0
      %p386 = por %p384, %p385
      %p387 = scmp.ne.s32.totalorder %s379, %s381
      %p388 = scmp.eq.s32.totalorder %s35, 1
      %p389 = por %p387, %p388
      %p390 = scmp.ne.s32.totalorder %s381, %s382
      %p391 = scmp.eq.s32.totalorder %s35, 0
      %p392 = por %p390, %p391
      %p393 = scmp.ne.s32.totalorder %s381, %s382
      %p394 = scmp.eq.s32.totalorder %s36, 1
      %p395 = por %p393, %p394
      %p397 = scmp.ne.s32.totalorder %s382, %s396
      %p398 = scmp.eq.s32.totalorder %s36, 0
      %p399 = por %p397, %p398
      %s400 = ssub.s32 %s30, %s37
      %p401 = scmp.eq.s32.totalorder %s400, 0
      %s403 = sadd.s32 %s402, 1
      %s404 = scalar_select %p401, %s402, %s403
      %p407 = pneg %p401
      %p408 = scmp.eq.s32.totalorder %s30, 1
      %p409 = por %p407, %p408
      %p410 = scmp.ne.s32.totalorder %s402, %s405
      %p411 = scmp.eq.s32.totalorder %s30, 0
      %p412 = por %p410, %p411
      %p413 = scmp.ne.s32.totalorder %s402, %s405
      %p414 = scmp.eq.s32.totalorder %s35, 1
      %p415 = por %p413, %p414
      %p416 = scmp.ne.s32.totalorder %s405, %s406
      %p417 = scmp.eq.s32.totalorder %s35, 0
      %p418 = por %p416, %p417
      %p419 = scmp.ne.s32.totalorder %s405, %s406
      %p420 = scmp.eq.s32.totalorder %s36, 1
      %p421 = por %p419, %p420
      %p423 = scmp.ne.s32.totalorder %s406, %s422
      %p424 = scmp.eq.s32.totalorder %s36, 0
      %p425 = por %p423, %p424
      %s426 = ssub.s32 %s30, %s37
      %p427 = scmp.eq.s32.totalorder %s426, 0
      %s429 = sadd.s32 %s428, 1
      %s430 = scalar_select %p427, %s428, %s429
      %p433 = pneg %p427
      %p434 = scmp.eq.s32.totalorder %s30, 1
      %p435 = por %p433, %p434
      %p436 = scmp.ne.s32.totalorder %s428, %s431
      %p437 = scmp.eq.s32.totalorder %s30, 0
      %p438 = por %p436, %p437
      %p439 = scmp.ne.s32.totalorder %s428, %s431
      %p440 = scmp.eq.s32.totalorder %s35, 1
      %p441 = por %p439, %p440
      %p442 = scmp.ne.s32.totalorder %s431, %s432
      %p443 = scmp.eq.s32.totalorder %s35, 0
      %p444 = por %p442, %p443
      %p445 = scmp.ne.s32.totalorder %s431, %s432
      %p446 = scmp.eq.s32.totalorder %s36, 1
      %p447 = por %p445, %p446
      %p449 = scmp.ne.s32.totalorder %s432, %s448
      %p450 = scmp.eq.s32.totalorder %s36, 0
      %p451 = por %p449, %p450
      %p452 = scmp.le.s32.totalorder 1, %s30
      %p453 = scmp.lt.s32.totalorder %s30, 3
      %p454 = pnand %p452, %p453
      %p455 = pneg %p454
      // Predicated region
      $region9: #{text_autoencoder_forward.1} parent=5 // pred_check
        _
      $region10: #{text_autoencoder_forward.1} parent=5 // pred_check_branch
        %457 = sbr.rel (%p454) target = $region12
      $region11: #{text_autoencoder_forward.1} parent=5 // pred_region
        %s458 = ssub.s32 %s30, 1
        // Predicated region
        $region13: #{text_autoencoder_forward.1} parent=11 // pred_check
          %p459 = pneg %p77
        $region14: #{text_autoencoder_forward.1} parent=11 // pred_check_branch
          %461 = sbr.rel (%p459) target = $region16
        $region15: #{text_autoencoder_forward.1} parent=11 // pred_region
          _
        $region16: #{text_autoencoder_forward.1} parent=11 // pred_fallthru
          _
        // Predicated region
        $region17: #{text_autoencoder_forward.1} parent=11 // pred_check
          %p462 = pneg %p98
        $region18: #{text_autoencoder_forward.1} parent=11 // pred_check_branch
          %464 = sbr.rel (%p462) target = $region20
        $region19: #{text_autoencoder_forward.1} parent=11 // pred_region
          %466 = vsyncadd [#allocation3], 0
          %s468 = sshll.u32 %s2, 4
          %s469 = int_to_ptr.hbm [resolvable:$true] %s468
          %s470 = sshll.u32 [#allocation2], 4
          %s471 = int_to_ptr.vmem [resolvable:$true] %s470
          %473 = dma.hbm_to_vmem [thread:$0]  %s469, 32, %s471, [#allocation3]
        $region20: #{text_autoencoder_forward.1} parent=11 // pred_fallthru
          _
        // Predicated region
        $region21: #{text_autoencoder_forward.1} parent=11 // pred_check
          %p474 = pneg %p119
        $region22: #{text_autoencoder_forward.1} parent=11 // pred_check_branch
          %476 = sbr.rel (%p474) target = $region24
        $region23: #{text_autoencoder_forward.1} parent=11 // pred_region
          _
        $region24: #{text_autoencoder_forward.1} parent=11 // pred_fallthru
          _
        // Predicated region
        $region25: #{text_autoencoder_forward.1} parent=11 // pred_check
          %p477 = pneg %p140
        $region26: #{text_autoencoder_forward.1} parent=11 // pred_check_branch
          %479 = sbr.rel (%p477) target = $region28
        $region27: #{text_autoencoder_forward.1} parent=11 // pred_region
          %481 = vsyncadd [#allocation5], 0
          %s483 = sshll.u32 %s4, 4
          %s484 = int_to_ptr.hbm [resolvable:$true] %s483
          %s485 = sshll.u32 [#allocation4], 4
          %s486 = int_to_ptr.vmem [resolvable:$true] %s485
          %488 = dma.hbm_to_vmem [thread:$0]  %s484, 16, %s486, [#allocation5]
        $region28: #{text_autoencoder_forward.1} parent=11 // pred_fallthru
          _
        // Predicated region
        $region29: #{text_autoencoder_forward.1} parent=11 // pred_check
          %p489 = pneg %p161
        $region30: #{text_autoencoder_forward.1} parent=11 // pred_check_branch
          %491 = sbr.rel (%p489) target = $region32
        $region31: #{text_autoencoder_forward.1} parent=11 // pred_region
          _
        $region32: #{text_autoencoder_forward.1} parent=11 // pred_fallthru
          _
        // Predicated region
        $region33: #{text_autoencoder_forward.1} parent=11 // pred_check
          %p492 = pneg %p182
        $region34: #{text_autoencoder_forward.1} parent=11 // pred_check_branch
          %494 = sbr.rel (%p492) target = $region36
        $region35: #{text_autoencoder_forward.1} parent=11 // pred_region
          _
        $region36: #{text_autoencoder_forward.1} parent=11 // pred_fallthru
          _
        // Predicated region
        $region37: #{text_autoencoder_forward.1} parent=11 // pred_check
          %p495 = pneg %p203
        $region38: #{text_autoencoder_forward.1} parent=11 // pred_check_branch
          %497 = sbr.rel (%p495) target = $region40
        $region39: #{text_autoencoder_forward.1} parent=11 // pred_region
          _
        $region40: #{text_autoencoder_forward.1} parent=11 // pred_fallthru
          _
        // Predicated region
        $region41: #{text_autoencoder_forward.1} parent=11 // pred_check
          %p498 = pneg %p224
        $region42: #{text_autoencoder_forward.1} parent=11 // pred_check_branch
          %500 = sbr.rel (%p498) target = $region44
        $region43: #{text_autoencoder_forward.1} parent=11 // pred_region
          _
        $region44: #{text_autoencoder_forward.1} parent=11 // pred_fallthru
          _
        // Predicated region
        $region45: #{text_autoencoder_forward.1} parent=11 // pred_check
          %p501 = pneg %p245
        $region46: #{text_autoencoder_forward.1} parent=11 // pred_check_branch
          %503 = sbr.rel (%p501) target = $region48
        $region47: #{text_autoencoder_forward.1} parent=11 // pred_region
          %505 = vsyncadd [#allocation5], 0
          %s506 = sshll.u32 %s9, 4
          %s507 = int_to_ptr.hbm [resolvable:$true] %s506
          %s508 = sshll.u32 [#allocation6], 4
          %s509 = int_to_ptr.vmem [resolvable:$true] %s508
          %514 = dma.hbm_to_vmem [thread:$0]  %s507, 1024, %s509, [#allocation5], 64, 64, 4
        $region48: #{text_autoencoder_forward.1} parent=11 // pred_fallthru
          _
        // Predicated region
        $region49: #{text_autoencoder_forward.1} parent=11 // pred_check
          %p515 = pneg %p266
        $region50: #{text_autoencoder_forward.1} parent=11 // pred_check_branch
          %517 = sbr.rel (%p515) target = $region52
        $region51: #{text_autoencoder_forward.1} parent=11 // pred_region
          %519 = vsyncadd [#allocation8], 0
          %s521 = sshll.u32 %s10, 4
          %s522 = int_to_ptr.hbm [resolvable:$true] %s521
          %s523 = sshll.u32 [#allocation7], 4
          %s524 = int_to_ptr.vmem [resolvable:$true] %s523
          %526 = dma.hbm_to_vmem [thread:$0]  %s522, 16, %s524, [#allocation8]
        $region52: #{text_autoencoder_forward.1} parent=11 // pred_fallthru
          _
        // Predicated region
        $region53: #{text_autoencoder_forward.1} parent=11 // pred_check
          %p527 = pneg %p287
        $region54: #{text_autoencoder_forward.1} parent=11 // pred_check_branch
          %529 = sbr.rel (%p527) target = $region56
        $region55: #{text_autoencoder_forward.1} parent=11 // pred_region
          %531 = vsyncadd [#allocation8], 0
          %s532 = sshll.u32 %s11, 4
          %s533 = int_to_ptr.hbm [resolvable:$true] %s532
          %s534 = sshll.u32 [#allocation9], 4
          %s535 = int_to_ptr.vmem [resolvable:$true] %s534
          %540 = dma.hbm_to_vmem [thread:$0]  %s533, 1024, %s535, [#allocation8], 64, 64, 4
        $region56: #{text_autoencoder_forward.1} parent=11 // pred_fallthru
          _
        // Predicated region
        $region57: #{text_autoencoder_forward.1} parent=11 // pred_check
          %p541 = pneg %p308
        $region58: #{text_autoencoder_forward.1} parent=11 // pred_check_branch
          %543 = sbr.rel (%p541) target = $region60
        $region59: #{text_autoencoder_forward.1} parent=11 // pred_region
          %545 = vsyncadd [#allocation11], 0
          %s547 = sshll.u32 %s12, 4
          %s548 = int_to_ptr.hbm [resolvable:$true] %s547
          %s549 = sshll.u32 [#allocation10], 4
          %s550 = int_to_ptr.vmem [resolvable:$true] %s549
          %552 = dma.hbm_to_vmem [thread:$0]  %s548, 16, %s550, [#allocation11]
        $region60: #{text_autoencoder_forward.1} parent=11 // pred_fallthru
          _
        // Predicated region
        $region61: #{text_autoencoder_forward.1} parent=11 // pred_check
          %p553 = pneg %p329
        $region62: #{text_autoencoder_forward.1} parent=11 // pred_check_branch
          %555 = sbr.rel (%p553) target = $region64
        $region63: #{text_autoencoder_forward.1} parent=11 // pred_region
          _
        $region64: #{text_autoencoder_forward.1} parent=11 // pred_fallthru
          _
        // Predicated region
        $region65: #{text_autoencoder_forward.1} parent=11 // pred_check
          %p556 = pneg %p350
        $region66: #{text_autoencoder_forward.1} parent=11 // pred_check_branch
          %558 = sbr.rel (%p556) target = $region68
        $region67: #{text_autoencoder_forward.1} parent=11 // pred_region
          %560 = vsyncadd [#allocation11], 0
          %s562 = sshll.u32 %s14, 4
          %s563 = int_to_ptr.hbm [resolvable:$true] %s562
          %s564 = sshll.u32 [#allocation12], 4
          %s565 = int_to_ptr.vmem [resolvable:$true] %s564
          %567 = dma.hbm_to_vmem [thread:$0]  %s563, 32, %s565, [#allocation11]
        $region68: #{text_autoencoder_forward.1} parent=11 // pred_fallthru
          _
        // Predicated region
        $region69: #{text_autoencoder_forward.1} parent=11 // pred_check
          %p568 = pneg %p371
        $region70: #{text_autoencoder_forward.1} parent=11 // pred_check_branch
          %570 = sbr.rel (%p568) target = $region72
        $region71: #{text_autoencoder_forward.1} parent=11 // pred_region
          _
        $region72: #{text_autoencoder_forward.1} parent=11 // pred_fallthru
          _
        // Predicated region
        $region73: #{text_autoencoder_forward.1} parent=11 // pred_check
          %p571 = pneg %p392
        $region74: #{text_autoencoder_forward.1} parent=11 // pred_check_branch
          %573 = sbr.rel (%p571) target = $region76
        $region75: #{text_autoencoder_forward.1} parent=11 // pred_region
          %575 = vsyncadd [#allocation14], 0
          %s577 = sshll.u32 %s16, 4
          %s578 = int_to_ptr.hbm [resolvable:$true] %s577
          %s579 = sshll.u32 [#allocation13], 4
          %s580 = int_to_ptr.vmem [resolvable:$true] %s579
          %582 = dma.hbm_to_vmem [thread:$0]  %s578, 16, %s580, [#allocation14]
        $region76: #{text_autoencoder_forward.1} parent=11 // pred_fallthru
          _
      $region12: #{text_autoencoder_forward.1} parent=5 // pred_fallthru
        _
      %p583 = scmp.lt.s32.totalorder %s30, 2
      // Predicated region
      $region77: #{text_autoencoder_forward.1} parent=5 // pred_check
        %p584 = pneg %p583
      $region78: #{text_autoencoder_forward.1} parent=5 // pred_check_branch
        %586 = sbr.rel (%p584) target = $region80
      $region79: #{text_autoencoder_forward.1} parent=5 // pred_region
        // Predicated region
        $region81: #{text_autoencoder_forward.1} parent=79 // pred_check
          %p587 = pneg %p50
        $region82: #{text_autoencoder_forward.1} parent=79 // pred_check_branch
          %589 = sbr.rel (%p587) target = $region84
        $region83: #{text_autoencoder_forward.1} parent=79 // pred_region
          %s590 = smul.u32 16, %s30
          %p591 = scmp.lt.s32.totalorder %s590, 31
          %s592 = scalar_select %p591, %s590, 31
          %s593 = smul.addr %s592, 8
          %s594 = scalar_lea.vmem %s0, %s593
          %s595 = smul.u32 16, %s30
        $region84: #{text_autoencoder_forward.1} parent=79 // pred_fallthru
          _
      $region80: #{text_autoencoder_forward.1} parent=5 // pred_fallthru
        _
      %p596 = scmp.le.s32.totalorder 1, %s30
      %p597 = scmp.lt.s32.totalorder %s30, 3
      %p598 = pnand %p596, %p597
      %p599 = pneg %p598
      // Predicated region
      $region85: #{text_autoencoder_forward.1} parent=5 // pred_check
        _
      $region86: #{text_autoencoder_forward.1} parent=5 // pred_check_branch
        %601 = sbr.rel (%p598) target = $region88
      $region87: #{text_autoencoder_forward.1} parent=5 // pred_region
        %s602 = ssub.s32 %s30, 1
        // Predicated region
        $region89: #{text_autoencoder_forward.1} parent=87 // pred_check
          %p603 = pneg %p98
        $region90: #{text_autoencoder_forward.1} parent=87 // pred_check_branch
          %605 = sbr.rel (%p603) target = $region92
        $region91: #{text_autoencoder_forward.1} parent=87 // pred_region
          %607 = dma.done [#allocation3], 32
        $region92: #{text_autoencoder_forward.1} parent=87 // pred_fallthru
          _
        // Predicated region
        $region93: #{text_autoencoder_forward.1} parent=87 // pred_check
          %p608 = pneg %p140
        $region94: #{text_autoencoder_forward.1} parent=87 // pred_check_branch
          %610 = sbr.rel (%p608) target = $region96
        $region95: #{text_autoencoder_forward.1} parent=87 // pred_region
          %612 = dma.done [#allocation5], 16
        $region96: #{text_autoencoder_forward.1} parent=87 // pred_fallthru
          _
        // Predicated region
        $region97: #{text_autoencoder_forward.1} parent=87 // pred_check
          %p613 = pneg %p245
        $region98: #{text_autoencoder_forward.1} parent=87 // pred_check_branch
          %615 = sbr.rel (%p613) target = $region100
        $region99: #{text_autoencoder_forward.1} parent=87 // pred_region
          %617 = dma.done [#allocation5], 1024
        $region100: #{text_autoencoder_forward.1} parent=87 // pred_fallthru
          _
        // Predicated region
        $region101: #{text_autoencoder_forward.1} parent=87 // pred_check
          %p618 = pneg %p266
        $region102: #{text_autoencoder_forward.1} parent=87 // pred_check_branch
          %620 = sbr.rel (%p618) target = $region104
        $region103: #{text_autoencoder_forward.1} parent=87 // pred_region
          %622 = dma.done [#allocation8], 16
        $region104: #{text_autoencoder_forward.1} parent=87 // pred_fallthru
          _
        // Predicated region
        $region105: #{text_autoencoder_forward.1} parent=87 // pred_check
          %p623 = pneg %p287
        $region106: #{text_autoencoder_forward.1} parent=87 // pred_check_branch
          %625 = sbr.rel (%p623) target = $region108
        $region107: #{text_autoencoder_forward.1} parent=87 // pred_region
          %627 = dma.done [#allocation8], 1024
        $region108: #{text_autoencoder_forward.1} parent=87 // pred_fallthru
          _
        // Predicated region
        $region109: #{text_autoencoder_forward.1} parent=87 // pred_check
          %p628 = pneg %p308
        $region110: #{text_autoencoder_forward.1} parent=87 // pred_check_branch
          %630 = sbr.rel (%p628) target = $region112
        $region111: #{text_autoencoder_forward.1} parent=87 // pred_region
          %632 = dma.done [#allocation11], 16
        $region112: #{text_autoencoder_forward.1} parent=87 // pred_fallthru
          _
        // Predicated region
        $region113: #{text_autoencoder_forward.1} parent=87 // pred_check
          %p633 = pneg %p350
        $region114: #{text_autoencoder_forward.1} parent=87 // pred_check_branch
          %635 = sbr.rel (%p633) target = $region116
        $region115: #{text_autoencoder_forward.1} parent=87 // pred_region
          %637 = dma.done [#allocation11], 32
        $region116: #{text_autoencoder_forward.1} parent=87 // pred_fallthru
          _
        // Predicated region
        $region117: #{text_autoencoder_forward.1} parent=87 // pred_check
          %p638 = pneg %p392
        $region118: #{text_autoencoder_forward.1} parent=87 // pred_check_branch
          %640 = sbr.rel (%p638) target = $region120
        $region119: #{text_autoencoder_forward.1} parent=87 // pred_region
          %642 = dma.done [#allocation14], 16
        $region120: #{text_autoencoder_forward.1} parent=87 // pred_fallthru
          _
        %s643 = smul.u32 16, %s35
        %p644 = scmp.lt.s32.totalorder %s643, 31
        %s645 = scalar_select %p644, %s643, 31
        %s646 = smul.addr %s645, 8
        %s647 = scalar_lea.vmem %s0, %s646
        %p648 = pneg %p56
        %p649 = pneg %p53
        %p650 = pneg %p77
        %p651 = pneg %p74
        %p652 = pneg %p98
        %p653 = pneg %p95
        %p654 = pneg %p119
        %p655 = pneg %p116
        %p656 = pneg %p140
        %p657 = pneg %p137
        %p658 = pneg %p161
        %p659 = pneg %p158
        %p660 = pneg %p182
        %p661 = pneg %p179
        %p662 = pneg %p203
        %p663 = pneg %p200
        %p664 = pneg %p224
        %p665 = pneg %p221
        %p666 = pneg %p245
        %p667 = pneg %p242
        %p668 = pneg %p266
        %p669 = pneg %p263
        %p670 = pneg %p287
        %p671 = pneg %p284
        %p672 = pneg %p308
        %p673 = pneg %p305
        %p674 = pneg %p329
        %p675 = pneg %p326
        %p676 = pneg %p350
        %p677 = pneg %p347
        %p678 = pneg %p371
        %p679 = pneg %p368
        %p680 = pneg %p392
        %p681 = pneg %p389
        %p682 = pneg %p418
        %p683 = pneg %p415
        %s684 = smul.u32 16, %s35
        %p685 = scmp.lt.s32.totalorder %s684, 31
        %s686 = scalar_select %p685, %s684, 31
        %s687 = smul.addr %s686, 8
        %s688 = scalar_lea.vmem %s17, %s687
        %p689 = pneg %p444
        %p690 = pneg %p441
        %s691 = smul.u32 16, %s35
        %p692 = scmp.lt.s32.totalorder %s691, 31
        %s693 = scalar_select %p692, %s691, 31
        %s694 = smul.addr %s693, 8
        %s695 = scalar_lea.vmem %s18, %s694
        %s696 = smul.u32 16, %s35
        %p697 = scmp.lt.s32.totalorder %s696, 31
        %s698 = scalar_select %p697, %s696, 31
        %s699 = smul.addr %s698, 8
        %s700 = scalar_lea.vmem %s0, %s699
        %s701 = smul.u32 16, %s35
        %s702 = smul.u32 16, %s35
        %p703 = scmp.lt.s32.totalorder %s702, 31
        %s704 = scalar_select %p703, %s702, 31
        %s705 = smul.addr %s704, 8
        %s706 = scalar_lea.vmem %s17, %s705
        %s707 = smul.u32 16, %s35
        %s708 = smul.u32 16, %s35
        %p709 = scmp.lt.s32.totalorder %s708, 31
        %s710 = scalar_select %p709, %s708, 31
        %s711 = smul.addr %s710, 8
        %s712 = scalar_lea.vmem %s18, %s711
        %s713 = smul.u32 16, %s35
        %v715 = vld [vmem:[%s700] sm:$0xff]
        %v716 = vld [vmem:[%s700 + $0x8] sm:$0xff]
        %v717 = vld [vmem:[%s700 + $0x10] sm:$0xff]
        %v718 = vld [vmem:[%s700 + $0x18] sm:$0xff]
        %v719 = vld [vmem:[%s700 + $0x20] sm:$0xff]
        %v720 = vld [vmem:[%s700 + $0x28] sm:$0xff]
        %v721 = vld [vmem:[%s700 + $0x30] sm:$0xff]
        %v722 = vld [vmem:[%s700 + $0x38] sm:$0xff]
        %v723 = vld [vmem:[%s700 + $0x40] sm:$0xff]
        %v724 = vld [vmem:[%s700 + $0x48] sm:$0xff]
        %v725 = vld [vmem:[%s700 + $0x50] sm:$0xff]
        %v726 = vld [vmem:[%s700 + $0x58] sm:$0xff]
        %v727 = vld [vmem:[%s700 + $0x60] sm:$0xff]
        %v728 = vld [vmem:[%s700 + $0x68] sm:$0xff]
        %v729 = vld [vmem:[%s700 + $0x70] sm:$0xff]
        %v730 = vld [vmem:[%s700 + $0x78] sm:$0xff]
        %v731 = vpack.c.bf16 %v716, %v715
        %v732 = vpack.c.bf16 %v718, %v717
        %v733 = vpack.c.bf16 %v720, %v719
        %v734 = vpack.c.bf16 %v722, %v721
        %v735 = vpack.c.bf16 %v724, %v723
        %v736 = vpack.c.bf16 %v726, %v725
        %v737 = vpack.c.bf16 %v728, %v727
        %v738 = vpack.c.bf16 %v730, %v729
        %v739 = vld [vmem:[%s1] sm:$0xff]
        %v740 = vld [vmem:[%s1 + $0x8] sm:$0xff]
        %v741 = vld [vmem:[%s1 + $0x10] sm:$0xff]
        %v742 = vld [vmem:[%s1 + $0x18] sm:$0xff]
        %v743 = vld [vmem:[%s1 + $0x20] sm:$0xff]
        %v744 = vld [vmem:[%s1 + $0x28] sm:$0xff]
        %v745 = vld [vmem:[%s1 + $0x30] sm:$0xff]
        %v746 = vld [vmem:[%s1 + $0x38] sm:$0xff]
        %v747 = vld [vmem:[#allocation2] sm:$0x3]
        %v749 = vperm.slane %v747, 0
        %v750 = vperm.slane %v747, 1
        %v761 = vunpack.c.l.b16 %v739
        %v762 = vunpack.c.h.b16 %v739
        %v763 = vunpack.c.l.b16 %v740
        %v764 = vunpack.c.h.b16 %v740
        %v765 = vunpack.c.l.b16 %v741
        %v766 = vunpack.c.h.b16 %v741
        %v767 = vunpack.c.l.b16 %v742
        %v768 = vunpack.c.h.b16 %v742
        %v769 = vunpack.c.l.b16 %v743
        %v770 = vunpack.c.h.b16 %v743
        %v771 = vunpack.c.l.b16 %v744
        %v772 = vunpack.c.h.b16 %v744
        %v773 = vunpack.c.l.b16 %v745
        %v774 = vunpack.c.h.b16 %v745
        %v775 = vunpack.c.l.b16 %v746
        %v776 = vunpack.c.h.b16 %v746
        %v777 = vpack.c.b16 %v763, %v761
        %v778 = vpack.c.b16 %v764, %v762
        %v779 = vpack.c.b16 %v767, %v765
        %v780 = vpack.c.b16 %v768, %v766
        %v781 = vpack.c.b16 %v771, %v769
        %v782 = vpack.c.b16 %v772, %v770
        %v783 = vpack.c.b16 %v775, %v773
        %v784 = vpack.c.b16 %v776, %v774
        %vm793 = vcmask 523264
        %v795 = vsel %vm793, %v731, 0
        %v798 = vsel %vm793, %v732, 0
        %v801 = vsel %vm793, %v733, 0
        %v804 = vsel %vm793, %v734, 0
        %v807 = vsel %vm793, %v735, 0
        %v810 = vsel %vm793, %v736, 0
        %v813 = vsel %vm793, %v737, 0
        %v816 = vsel %vm793, %v738, 0
        %818 = vmatpush.bf16.msra.mxu0 0
        %819 = vmatpush.bf16.msra.mxu0 0
        %820 = vmatpush.bf16.msra.mxu0 0
        %821 = vmatpush.bf16.msra.mxu0 0
        %822 = vmatpush.bf16.msra.mxu0 %v783
        %823 = vmatpush.bf16.msra.mxu0 %v781
        %824 = vmatpush.bf16.msra.mxu0 %v779
        %825 = vmatpush.bf16.msra.mxu0 %v777
        %826 = vmatmul.bf16.gmra.mxu0 %v795
        %v827 = vpop.f32.mrf.mxu0
        %v828 = vadd.f32 %v749, %v827
        %v829 = vpop.f32.mrf.mxu0
        %v830 = vadd.f32 %v749, %v829
        %831 = vmatmul.bf16.gmra.mxu0 %v798
        %v832 = vpop.f32.mrf.mxu0
        %v833 = vadd.f32 %v749, %v832
        %v834 = vpop.f32.mrf.mxu0
        %v835 = vadd.f32 %v749, %v834
        %836 = vmatmul.bf16.gmra.mxu0 %v801
        %v837 = vpop.f32.mrf.mxu0
        %v838 = vadd.f32 %v749, %v837
        %v839 = vpop.f32.mrf.mxu0
        %v840 = vadd.f32 %v749, %v839
        %841 = vmatmul.bf16.gmra.mxu0 %v804
        %v842 = vpop.f32.mrf.mxu0
        %v843 = vadd.f32 %v749, %v842
        %v844 = vpop.f32.mrf.mxu0
        %v845 = vadd.f32 %v749, %v844
        %846 = vmatmul.bf16.gmra.mxu0 %v807
        %v847 = vpop.f32.mrf.mxu0
        %v848 = vadd.f32 %v749, %v847
        %v849 = vpop.f32.mrf.mxu0
        %v850 = vadd.f32 %v749, %v849
        %851 = vmatmul.bf16.gmra.mxu0 %v810
        %v852 = vpop.f32.mrf.mxu0
        %v853 = vadd.f32 %v749, %v852
        %v854 = vpop.f32.mrf.mxu0
        %v855 = vadd.f32 %v749, %v854
        %856 = vmatmul.bf16.gmra.mxu0 %v813
        %v857 = vpop.f32.mrf.mxu0
        %v858 = vadd.f32 %v749, %v857
        %v859 = vpop.f32.mrf.mxu0
        %v860 = vadd.f32 %v749, %v859
        %861 = vmatmul.bf16.gmra.mxu0 %v816
        %v862 = vpop.f32.mrf.mxu0
        %v863 = vadd.f32 %v749, %v862
        %v864 = vpop.f32.mrf.mxu0
        %v865 = vadd.f32 %v749, %v864
        %866 = vdwg.mxu0
        %867 = vmatpush.bf16.msra.mxu0 0
        %868 = vmatpush.bf16.msra.mxu0 0
        %869 = vmatpush.bf16.msra.mxu0 0
        %870 = vmatpush.bf16.msra.mxu0 0
        %871 = vmatpush.bf16.msra.mxu0 %v784
        %872 = vmatpush.bf16.msra.mxu0 %v782
        %873 = vmatpush.bf16.msra.mxu0 %v780
        %874 = vmatpush.bf16.msra.mxu0 %v778
        %875 = vmatmul.bf16.gmra.mxu0 %v795
        %v876 = vpop.f32.mrf.mxu0
        %v877 = vadd.f32 %v750, %v876
        %v878 = vpop.f32.mrf.mxu0
        %v879 = vadd.f32 %v750, %v878
        %880 = vmatmul.bf16.gmra.mxu0 %v798
        %v881 = vpop.f32.mrf.mxu0
        %v882 = vadd.f32 %v750, %v881
        %v883 = vpop.f32.mrf.mxu0
        %v884 = vadd.f32 %v750, %v883
        %885 = vmatmul.bf16.gmra.mxu0 %v801
        %v886 = vpop.f32.mrf.mxu0
        %v887 = vadd.f32 %v750, %v886
        %v888 = vpop.f32.mrf.mxu0
        %v889 = vadd.f32 %v750, %v888
        %890 = vmatmul.bf16.gmra.mxu0 %v804
        %v891 = vpop.f32.mrf.mxu0
        %v892 = vadd.f32 %v750, %v891
        %v893 = vpop.f32.mrf.mxu0
        %v894 = vadd.f32 %v750, %v893
        %895 = vmatmul.bf16.gmra.mxu0 %v807
        %v896 = vpop.f32.mrf.mxu0
        %v897 = vadd.f32 %v750, %v896
        %v898 = vpop.f32.mrf.mxu0
        %v899 = vadd.f32 %v750, %v898
        %900 = vmatmul.bf16.gmra.mxu0 %v810
        %v901 = vpop.f32.mrf.mxu0
        %v902 = vadd.f32 %v750, %v901
        %v903 = vpop.f32.mrf.mxu0
        %v904 = vadd.f32 %v750, %v903
        %905 = vmatmul.bf16.gmra.mxu0 %v813
        %v906 = vpop.f32.mrf.mxu0
        %v907 = vadd.f32 %v750, %v906
        %v908 = vpop.f32.mrf.mxu0
        %v909 = vadd.f32 %v750, %v908
        %910 = vmatmul.bf16.gmra.mxu0 %v816
        %v911 = vpop.f32.mrf.mxu0
        %v912 = vadd.f32 %v750, %v911
        %v913 = vpop.f32.mrf.mxu0
        %v914 = vadd.f32 %v750, %v913
        %915 = vdwg.mxu0
        %v916 = vmax.f32 %v828, 0.0
        %v917 = vmax.f32 %v877, 0.0
        %v918 = vmax.f32 %v830, 0.0
        %v919 = vmax.f32 %v879, 0.0
        %v920 = vmax.f32 %v833, 0.0
        %v921 = vmax.f32 %v882, 0.0
        %v922 = vmax.f32 %v835, 0.0
        %v923 = vmax.f32 %v884, 0.0
        %v924 = vmax.f32 %v838, 0.0
        %v925 = vmax.f32 %v887, 0.0
        %v926 = vmax.f32 %v840, 0.0
        %v927 = vmax.f32 %v889, 0.0
        %v928 = vmax.f32 %v843, 0.0
        %v929 = vmax.f32 %v892, 0.0
        %v930 = vmax.f32 %v845, 0.0
        %v931 = vmax.f32 %v894, 0.0
        %v932 = vmax.f32 %v848, 0.0
        %v933 = vmax.f32 %v897, 0.0
        %v934 = vmax.f32 %v850, 0.0
        %v935 = vmax.f32 %v899, 0.0
        %v936 = vmax.f32 %v853, 0.0
        %v937 = vmax.f32 %v902, 0.0
        %v938 = vmax.f32 %v855, 0.0
        %v939 = vmax.f32 %v904, 0.0
        %v940 = vmax.f32 %v858, 0.0
        %v941 = vmax.f32 %v907, 0.0
        %v942 = vmax.f32 %v860, 0.0
        %v943 = vmax.f32 %v909, 0.0
        %v944 = vmax.f32 %v863, 0.0
        %v945 = vmax.f32 %v912, 0.0
        %v946 = vmax.f32 %v865, 0.0
        %v947 = vmax.f32 %v914, 0.0
        %v948 = vpack.c.bf16 %v918, %v916
        %v949 = vpack.c.bf16 %v919, %v917
        %v950 = vpack.c.bf16 %v922, %v920
        %v951 = vpack.c.bf16 %v923, %v921
        %v952 = vpack.c.bf16 %v926, %v924
        %v953 = vpack.c.bf16 %v927, %v925
        %v954 = vpack.c.bf16 %v930, %v928
        %v955 = vpack.c.bf16 %v931, %v929
        %v956 = vpack.c.bf16 %v934, %v932
        %v957 = vpack.c.bf16 %v935, %v933
        %v958 = vpack.c.bf16 %v938, %v936
        %v959 = vpack.c.bf16 %v939, %v937
        %v960 = vpack.c.bf16 %v942, %v940
        %v961 = vpack.c.bf16 %v943, %v941
        %v962 = vpack.c.bf16 %v946, %v944
        %v963 = vpack.c.bf16 %v947, %v945
        %v964 = vld [vmem:[%s3] sm:$0xf]
        %v965 = vld [vmem:[%s3 + $0x4] sm:$0xf]
        %v966 = vld [vmem:[%s3 + $0x8] sm:$0xf]
        %v967 = vld [vmem:[%s3 + $0xc] sm:$0xf]
        %v968 = vld [vmem:[%s3 + $0x10] sm:$0xf]
        %v969 = vld [vmem:[%s3 + $0x14] sm:$0xf]
        %v970 = vld [vmem:[%s3 + $0x18] sm:$0xf]
        %v971 = vld [vmem:[%s3 + $0x1c] sm:$0xf]
        %v972 = vld [vmem:[%s3 + $0x20] sm:$0xf]
        %v973 = vld [vmem:[%s3 + $0x24] sm:$0xf]
        %v974 = vld [vmem:[%s3 + $0x28] sm:$0xf]
        %v975 = vld [vmem:[%s3 + $0x2c] sm:$0xf]
        %v976 = vld [vmem:[%s3 + $0x30] sm:$0xf]
        %v977 = vld [vmem:[%s3 + $0x34] sm:$0xf]
        %v978 = vld [vmem:[%s3 + $0x38] sm:$0xf]
        %v979 = vld [vmem:[%s3 + $0x3c] sm:$0xf]
        %v980 = vld [vmem:[%s3 + $0x40] sm:$0xf]
        %v981 = vld [vmem:[%s3 + $0x44] sm:$0xf]
        %v982 = vld [vmem:[%s3 + $0x48] sm:$0xf]
        %v983 = vld [vmem:[%s3 + $0x4c] sm:$0xf]
        %v984 = vld [vmem:[%s3 + $0x50] sm:$0xf]
        %v985 = vld [vmem:[%s3 + $0x54] sm:$0xf]
        %v986 = vld [vmem:[%s3 + $0x58] sm:$0xf]
        %v987 = vld [vmem:[%s3 + $0x5c] sm:$0xf]
        %v988 = vld [vmem:[%s3 + $0x60] sm:$0xf]
        %v989 = vld [vmem:[%s3 + $0x64] sm:$0xf]
        %v990 = vld [vmem:[%s3 + $0x68] sm:$0xf]
        %v991 = vld [vmem:[%s3 + $0x6c] sm:$0xf]
        %v992 = vld [vmem:[%s3 + $0x70] sm:$0xf]
        %v993 = vld [vmem:[%s3 + $0x74] sm:$0xf]
        %v994 = vld [vmem:[%s3 + $0x78] sm:$0xf]
        %v995 = vld [vmem:[%s3 + $0x7c] sm:$0xf]
        %v996 = vld [vmem:[#allocation4] sm:$0x1]
        %v998 = vperm.slane %v996, 0
        %v1032 = vunpack.c.l.b16 %v964
        %v1033 = vunpack.c.l.b16 %v965
        %v1034 = vunpack.c.l.b16 %v966
        %v1035 = vunpack.c.l.b16 %v967
        %v1036 = vunpack.c.l.b16 %v968
        %v1037 = vunpack.c.l.b16 %v969
        %v1038 = vunpack.c.l.b16 %v970
        %v1039 = vunpack.c.l.b16 %v971
        %v1040 = vunpack.c.l.b16 %v972
        %v1041 = vunpack.c.l.b16 %v973
        %v1042 = vunpack.c.l.b16 %v974
        %v1043 = vunpack.c.l.b16 %v975
        %v1044 = vunpack.c.l.b16 %v976
        %v1045 = vunpack.c.l.b16 %v977
        %v1046 = vunpack.c.l.b16 %v978
        %v1047 = vunpack.c.l.b16 %v979
        %v1048 = vunpack.c.l.b16 %v980
        %v1049 = vunpack.c.l.b16 %v981
        %v1050 = vunpack.c.l.b16 %v982
        %v1051 = vunpack.c.l.b16 %v983
        %v1052 = vunpack.c.l.b16 %v984
        %v1053 = vunpack.c.l.b16 %v985
        %v1054 = vunpack.c.l.b16 %v986
        %v1055 = vunpack.c.l.b16 %v987
        %v1056 = vunpack.c.l.b16 %v988
        %v1057 = vunpack.c.l.b16 %v989
        %v1058 = vunpack.c.l.b16 %v990
        %v1059 = vunpack.c.l.b16 %v991
        %v1060 = vunpack.c.l.b16 %v992
        %v1061 = vunpack.c.l.b16 %v993
        %v1062 = vunpack.c.l.b16 %v994
        %v1063 = vunpack.c.l.b16 %v995
        %v1064 = vpack.c.b16 %v1033, %v1032
        %v1065 = vpack.c.b16 %v1035, %v1034
        %v1066 = vpack.c.b16 %v1037, %v1036
        %v1067 = vpack.c.b16 %v1039, %v1038
        %v1068 = vpack.c.b16 %v1041, %v1040
        %v1069 = vpack.c.b16 %v1043, %v1042
        %v1070 = vpack.c.b16 %v1045, %v1044
        %v1071 = vpack.c.b16 %v1047, %v1046
        %v1072 = vpack.c.b16 %v1049, %v1048
        %v1073 = vpack.c.b16 %v1051, %v1050
        %v1074 = vpack.c.b16 %v1053, %v1052
        %v1075 = vpack.c.b16 %v1055, %v1054
        %v1076 = vpack.c.b16 %v1057, %v1056
        %v1077 = vpack.c.b16 %v1059, %v1058
        %v1078 = vpack.c.b16 %v1061, %v1060
        %v1079 = vpack.c.b16 %v1063, %v1062
        %1096 = vmatpush.bf16.msra.mxu0 %v1071
        %1097 = vmatpush.bf16.msra.mxu0 %v1070
        %1098 = vmatpush.bf16.msra.mxu0 %v1069
        %1099 = vmatpush.bf16.msra.mxu0 %v1068
        %1100 = vmatpush.bf16.msra.mxu0 %v1067
        %1101 = vmatpush.bf16.msra.mxu0 %v1066
        %1102 = vmatpush.bf16.msra.mxu0 %v1065
        %1103 = vmatpush.bf16.msra.mxu0 %v1064
        %1104 = vmatmul.bf16.gmra.mxu0 %v948
        %v1105 = vpop.f32.mrf.mxu0
        %v1106 = vadd.f32 %v998, %v1105
        %v1107 = vpop.f32.mrf.mxu0
        %v1108 = vadd.f32 %v998, %v1107
        %1109 = vmatmul.bf16.gmra.mxu0 %v950
        %v1110 = vpop.f32.mrf.mxu0
        %v1111 = vadd.f32 %v998, %v1110
        %v1112 = vpop.f32.mrf.mxu0
        %v1113 = vadd.f32 %v998, %v1112
        %1114 = vmatmul.bf16.gmra.mxu0 %v952
        %v1115 = vpop.f32.mrf.mxu0
        %v1116 = vadd.f32 %v998, %v1115
        %v1117 = vpop.f32.mrf.mxu0
        %v1118 = vadd.f32 %v998, %v1117
        %1119 = vmatmul.bf16.gmra.mxu0 %v954
        %v1120 = vpop.f32.mrf.mxu0
        %v1121 = vadd.f32 %v998, %v1120
        %v1122 = vpop.f32.mrf.mxu0
        %v1123 = vadd.f32 %v998, %v1122
        %1124 = vmatmul.bf16.gmra.mxu0 %v956
        %v1125 = vpop.f32.mrf.mxu0
        %v1126 = vadd.f32 %v998, %v1125
        %v1127 = vpop.f32.mrf.mxu0
        %v1128 = vadd.f32 %v998, %v1127
        %1129 = vmatmul.bf16.gmra.mxu0 %v958
        %v1130 = vpop.f32.mrf.mxu0
        %v1131 = vadd.f32 %v998, %v1130
        %v1132 = vpop.f32.mrf.mxu0
        %v1133 = vadd.f32 %v998, %v1132
        %1134 = vmatmul.bf16.gmra.mxu0 %v960
        %v1135 = vpop.f32.mrf.mxu0
        %v1136 = vadd.f32 %v998, %v1135
        %v1137 = vpop.f32.mrf.mxu0
        %v1138 = vadd.f32 %v998, %v1137
        %1139 = vmatmul.bf16.gmra.mxu0 %v962
        %v1140 = vpop.f32.mrf.mxu0
        %v1141 = vadd.f32 %v998, %v1140
        %v1142 = vpop.f32.mrf.mxu0
        %v1143 = vadd.f32 %v998, %v1142
        %1144 = vdwg.mxu0
        %1145 = vmatpush.bf16.msra.mxu0 %v1079
        %1146 = vmatpush.bf16.msra.mxu0 %v1078
        %1147 = vmatpush.bf16.msra.mxu0 %v1077
        %1148 = vmatpush.bf16.msra.mxu0 %v1076
        %1149 = vmatpush.bf16.msra.mxu0 %v1075
        %1150 = vmatpush.bf16.msra.mxu0 %v1074
        %1151 = vmatpush.bf16.msra.mxu0 %v1073
        %1152 = vmatpush.bf16.msra.mxu0 %v1072
        %1153 = vmatmul.bf16.gmra.mxu0 %v949
        %v1154 = vpop.f32.mrf.mxu0
        %v1155 = vadd.f32 %v1106, %v1154
        %v1156 = vpop.f32.mrf.mxu0
        %v1157 = vadd.f32 %v1108, %v1156
        %1158 = vmatmul.bf16.gmra.mxu0 %v951
        %v1159 = vpop.f32.mrf.mxu0
        %v1160 = vadd.f32 %v1111, %v1159
        %v1161 = vpop.f32.mrf.mxu0
        %v1162 = vadd.f32 %v1113, %v1161
        %1163 = vmatmul.bf16.gmra.mxu0 %v953
        %v1164 = vpop.f32.mrf.mxu0
        %v1165 = vadd.f32 %v1116, %v1164
        %v1166 = vpop.f32.mrf.mxu0
        %v1167 = vadd.f32 %v1118, %v1166
        %1168 = vmatmul.bf16.gmra.mxu0 %v955
        %v1169 = vpop.f32.mrf.mxu0
        %v1170 = vadd.f32 %v1121, %v1169
        %v1171 = vpop.f32.mrf.mxu0
        %v1172 = vadd.f32 %v1123, %v1171
        %1173 = vmatmul.bf16.gmra.mxu0 %v957
        %v1174 = vpop.f32.mrf.mxu0
        %v1175 = vadd.f32 %v1126, %v1174
        %v1176 = vpop.f32.mrf.mxu0
        %v1177 = vadd.f32 %v1128, %v1176
        %1178 = vmatmul.bf16.gmra.mxu0 %v959
        %v1179 = vpop.f32.mrf.mxu0
        %v1180 = vadd.f32 %v1131, %v1179
        %v1181 = vpop.f32.mrf.mxu0
        %v1182 = vadd.f32 %v1133, %v1181
        %1183 = vmatmul.bf16.gmra.mxu0 %v961
        %v1184 = vpop.f32.mrf.mxu0
        %v1185 = vadd.f32 %v1136, %v1184
        %v1186 = vpop.f32.mrf.mxu0
        %v1187 = vadd.f32 %v1138, %v1186
        %1188 = vmatmul.bf16.gmra.mxu0 %v963
        %v1189 = vpop.f32.mrf.mxu0
        %v1190 = vadd.f32 %v1141, %v1189
        %v1191 = vpop.f32.mrf.mxu0
        %v1192 = vadd.f32 %v1143, %v1191
        %1193 = vdwg.mxu0
        %v1194 = vmax.f32 %v1155, 0.0
        %v1195 = vmax.f32 %v1157, 0.0
        %v1196 = vmax.f32 %v1160, 0.0
        %v1197 = vmax.f32 %v1162, 0.0
        %v1198 = vmax.f32 %v1165, 0.0
        %v1199 = vmax.f32 %v1167, 0.0
        %v1200 = vmax.f32 %v1170, 0.0
        %v1201 = vmax.f32 %v1172, 0.0
        %v1202 = vmax.f32 %v1175, 0.0
        %v1203 = vmax.f32 %v1177, 0.0
        %v1204 = vmax.f32 %v1180, 0.0
        %v1205 = vmax.f32 %v1182, 0.0
        %v1206 = vmax.f32 %v1185, 0.0
        %v1207 = vmax.f32 %v1187, 0.0
        %v1208 = vmax.f32 %v1190, 0.0
        %v1209 = vmax.f32 %v1192, 0.0
        %v1210 = vpack.c.bf16 %v1195, %v1194
        %v1211 = vpack.c.bf16 %v1197, %v1196
        %v1212 = vpack.c.bf16 %v1199, %v1198
        %v1213 = vpack.c.bf16 %v1201, %v1200
        %v1214 = vpack.c.bf16 %v1203, %v1202
        %v1215 = vpack.c.bf16 %v1205, %v1204
        %v1216 = vpack.c.bf16 %v1207, %v1206
        %v1217 = vpack.c.bf16 %v1209, %v1208
        %v1218 = vld [vmem:[%s5] sm:$0xf]
        %v1219 = vld [vmem:[%s5 + $0x4] sm:$0xf]
        %v1220 = vld [vmem:[%s5 + $0x8] sm:$0xf]
        %v1221 = vld [vmem:[%s5 + $0xc] sm:$0xf]
        %v1222 = vld [vmem:[%s5 + $0x10] sm:$0xf]
        %v1223 = vld [vmem:[%s5 + $0x14] sm:$0xf]
        %v1224 = vld [vmem:[%s5 + $0x18] sm:$0xf]
        %v1225 = vld [vmem:[%s5 + $0x1c] sm:$0xf]
        %v1226 = vld [vmem:[%s5 + $0x20] sm:$0xf]
        %v1227 = vld [vmem:[%s5 + $0x24] sm:$0xf]
        %v1228 = vld [vmem:[%s5 + $0x28] sm:$0xf]
        %v1229 = vld [vmem:[%s5 + $0x2c] sm:$0xf]
        %v1230 = vld [vmem:[%s5 + $0x30] sm:$0xf]
        %v1231 = vld [vmem:[%s5 + $0x34] sm:$0xf]
        %v1232 = vld [vmem:[%s5 + $0x38] sm:$0xf]
        %v1233 = vld [vmem:[%s5 + $0x3c] sm:$0xf]
        %v1234 = vld [vmem:[%s6] sm:$0x1]
        %v1236 = vperm.slane %v1234, 0
        %v1254 = vunpack.c.l.b16 %v1218
        %v1255 = vunpack.c.l.b16 %v1219
        %v1256 = vunpack.c.l.b16 %v1220
        %v1257 = vunpack.c.l.b16 %v1221
        %v1258 = vunpack.c.l.b16 %v1222
        %v1259 = vunpack.c.l.b16 %v1223
        %v1260 = vunpack.c.l.b16 %v1224
        %v1261 = vunpack.c.l.b16 %v1225
        %v1262 = vunpack.c.l.b16 %v1226
        %v1263 = vunpack.c.l.b16 %v1227
        %v1264 = vunpack.c.l.b16 %v1228
        %v1265 = vunpack.c.l.b16 %v1229
        %v1266 = vunpack.c.l.b16 %v1230
        %v1267 = vunpack.c.l.b16 %v1231
        %v1268 = vunpack.c.l.b16 %v1232
        %v1269 = vunpack.c.l.b16 %v1233
        %v1270 = vpack.c.b16 %v1255, %v1254
        %v1271 = vpack.c.b16 %v1257, %v1256
        %v1272 = vpack.c.b16 %v1259, %v1258
        %v1273 = vpack.c.b16 %v1261, %v1260
        %v1274 = vpack.c.b16 %v1263, %v1262
        %v1275 = vpack.c.b16 %v1265, %v1264
        %v1276 = vpack.c.b16 %v1267, %v1266
        %v1277 = vpack.c.b16 %v1269, %v1268
        %1286 = vmatpush.bf16.msra.mxu0 %v1277
        %1287 = vmatpush.bf16.msra.mxu0 %v1276
        %1288 = vmatpush.bf16.msra.mxu0 %v1275
        %1289 = vmatpush.bf16.msra.mxu0 %v1274
        %1290 = vmatpush.bf16.msra.mxu0 %v1273
        %1291 = vmatpush.bf16.msra.mxu0 %v1272
        %1292 = vmatpush.bf16.msra.mxu0 %v1271
        %1293 = vmatpush.bf16.msra.mxu0 %v1270
        %1294 = vmatmul.bf16.gmra.mxu0 %v1210
        %v1295 = vpop.f32.mrf.mxu0
        %v1296 = vadd.f32 %v1236, %v1295
        %v1297 = vpop.f32.mrf.mxu0
        %v1298 = vadd.f32 %v1236, %v1297
        %1299 = vmatmul.bf16.gmra.mxu0 %v1211
        %v1300 = vpop.f32.mrf.mxu0
        %v1301 = vadd.f32 %v1236, %v1300
        %v1302 = vpop.f32.mrf.mxu0
        %v1303 = vadd.f32 %v1236, %v1302
        %1304 = vmatmul.bf16.gmra.mxu0 %v1212
        %v1305 = vpop.f32.mrf.mxu0
        %v1306 = vadd.f32 %v1236, %v1305
        %v1307 = vpop.f32.mrf.mxu0
        %v1308 = vadd.f32 %v1236, %v1307
        %1309 = vmatmul.bf16.gmra.mxu0 %v1213
        %v1310 = vpop.f32.mrf.mxu0
        %v1311 = vadd.f32 %v1236, %v1310
        %v1312 = vpop.f32.mrf.mxu0
        %v1313 = vadd.f32 %v1236, %v1312
        %1314 = vmatmul.bf16.gmra.mxu0 %v1214
        %v1315 = vpop.f32.mrf.mxu0
        %v1316 = vadd.f32 %v1236, %v1315
        %v1317 = vpop.f32.mrf.mxu0
        %v1318 = vadd.f32 %v1236, %v1317
        %1319 = vmatmul.bf16.gmra.mxu0 %v1215
        %v1320 = vpop.f32.mrf.mxu0
        %v1321 = vadd.f32 %v1236, %v1320
        %v1322 = vpop.f32.mrf.mxu0
        %v1323 = vadd.f32 %v1236, %v1322
        %1324 = vmatmul.bf16.gmra.mxu0 %v1216
        %v1325 = vpop.f32.mrf.mxu0
        %v1326 = vadd.f32 %v1236, %v1325
        %v1327 = vpop.f32.mrf.mxu0
        %v1328 = vadd.f32 %v1236, %v1327
        %1329 = vmatmul.bf16.gmra.mxu0 %v1217
        %v1330 = vpop.f32.mrf.mxu0
        %v1331 = vadd.f32 %v1236, %v1330
        %v1332 = vpop.f32.mrf.mxu0
        %v1333 = vadd.f32 %v1236, %v1332
        %1334 = vdwg.mxu0
        %v1335 = vmax.f32 %v1296, 0.0
        %v1336 = vmax.f32 %v1298, 0.0
        %v1337 = vmax.f32 %v1301, 0.0
        %v1338 = vmax.f32 %v1303, 0.0
        %v1339 = vmax.f32 %v1306, 0.0
        %v1340 = vmax.f32 %v1308, 0.0
        %v1341 = vmax.f32 %v1311, 0.0
        %v1342 = vmax.f32 %v1313, 0.0
        %v1343 = vmax.f32 %v1316, 0.0
        %v1344 = vmax.f32 %v1318, 0.0
        %v1345 = vmax.f32 %v1321, 0.0
        %v1346 = vmax.f32 %v1323, 0.0
        %v1347 = vmax.f32 %v1326, 0.0
        %v1348 = vmax.f32 %v1328, 0.0
        %v1349 = vmax.f32 %v1331, 0.0
        %v1350 = vmax.f32 %v1333, 0.0
        %v1351 = vpack.c.bf16 %v1336, %v1335
        %v1352 = vpack.c.bf16 %v1338, %v1337
        %v1353 = vpack.c.bf16 %v1340, %v1339
        %v1354 = vpack.c.bf16 %v1342, %v1341
        %v1355 = vpack.c.bf16 %v1344, %v1343
        %v1356 = vpack.c.bf16 %v1346, %v1345
        %v1357 = vpack.c.bf16 %v1348, %v1347
        %v1358 = vpack.c.bf16 %v1350, %v1349
        %v1359 = vld [vmem:[%s7] sm:$0xf]
        %v1360 = vld [vmem:[%s7 + $0x4] sm:$0xf]
        %v1361 = vld [vmem:[%s7 + $0x8] sm:$0xf]
        %v1362 = vld [vmem:[%s7 + $0xc] sm:$0xf]
        %v1363 = vld [vmem:[%s7 + $0x10] sm:$0xf]
        %v1364 = vld [vmem:[%s7 + $0x14] sm:$0xf]
        %v1365 = vld [vmem:[%s7 + $0x18] sm:$0xf]
        %v1366 = vld [vmem:[%s7 + $0x1c] sm:$0xf]
        %v1367 = vld [vmem:[%s7 + $0x20] sm:$0xf]
        %v1368 = vld [vmem:[%s7 + $0x24] sm:$0xf]
        %v1369 = vld [vmem:[%s7 + $0x28] sm:$0xf]
        %v1370 = vld [vmem:[%s7 + $0x2c] sm:$0xf]
        %v1371 = vld [vmem:[%s7 + $0x30] sm:$0xf]
        %v1372 = vld [vmem:[%s7 + $0x34] sm:$0xf]
        %v1373 = vld [vmem:[%s7 + $0x38] sm:$0xf]
        %v1374 = vld [vmem:[%s7 + $0x3c] sm:$0xf]
        %v1375 = vld [vmem:[%s8] sm:$0x1]
        %v1377 = vperm.slane %v1375, 0
        %v1395 = vunpack.c.l.b16 %v1359
        %v1396 = vunpack.c.l.b16 %v1360
        %v1397 = vunpack.c.l.b16 %v1361
        %v1398 = vunpack.c.l.b16 %v1362
        %v1399 = vunpack.c.l.b16 %v1363
        %v1400 = vunpack.c.l.b16 %v1364
        %v1401 = vunpack.c.l.b16 %v1365
        %v1402 = vunpack.c.l.b16 %v1366
        %v1403 = vunpack.c.l.b16 %v1367
        %v1404 = vunpack.c.l.b16 %v1368
        %v1405 = vunpack.c.l.b16 %v1369
        %v1406 = vunpack.c.l.b16 %v1370
        %v1407 = vunpack.c.l.b16 %v1371
        %v1408 = vunpack.c.l.b16 %v1372
        %v1409 = vunpack.c.l.b16 %v1373
        %v1410 = vunpack.c.l.b16 %v1374
        %v1411 = vpack.c.b16 %v1396, %v1395
        %v1412 = vpack.c.b16 %v1398, %v1397
        %v1413 = vpack.c.b16 %v1400, %v1399
        %v1414 = vpack.c.b16 %v1402, %v1401
        %v1415 = vpack.c.b16 %v1404, %v1403
        %v1416 = vpack.c.b16 %v1406, %v1405
        %v1417 = vpack.c.b16 %v1408, %v1407
        %v1418 = vpack.c.b16 %v1410, %v1409
        %1427 = vmatpush.bf16.msra.mxu0 %v1418
        %1428 = vmatpush.bf16.msra.mxu0 %v1417
        %1429 = vmatpush.bf16.msra.mxu0 %v1416
        %1430 = vmatpush.bf16.msra.mxu0 %v1415
        %1431 = vmatpush.bf16.msra.mxu0 %v1414
        %1432 = vmatpush.bf16.msra.mxu0 %v1413
        %1433 = vmatpush.bf16.msra.mxu0 %v1412
        %1434 = vmatpush.bf16.msra.mxu0 %v1411
        %1435 = vmatmul.bf16.gmra.mxu0 %v1351
        %v1436 = vpop.f32.mrf.mxu0
        %v1437 = vadd.f32 %v1377, %v1436
        %v1438 = vpop.f32.mrf.mxu0
        %v1439 = vadd.f32 %v1377, %v1438
        %1440 = vmatmul.bf16.gmra.mxu0 %v1352
        %v1441 = vpop.f32.mrf.mxu0
        %v1442 = vadd.f32 %v1377, %v1441
        %v1443 = vpop.f32.mrf.mxu0
        %v1444 = vadd.f32 %v1377, %v1443
        %1445 = vmatmul.bf16.gmra.mxu0 %v1353
        %v1446 = vpop.f32.mrf.mxu0
        %v1447 = vadd.f32 %v1377, %v1446
        %v1448 = vpop.f32.mrf.mxu0
        %v1449 = vadd.f32 %v1377, %v1448
        %1450 = vmatmul.bf16.gmra.mxu0 %v1354
        %v1451 = vpop.f32.mrf.mxu0
        %v1452 = vadd.f32 %v1377, %v1451
        %v1453 = vpop.f32.mrf.mxu0
        %v1454 = vadd.f32 %v1377, %v1453
        %1455 = vmatmul.bf16.gmra.mxu0 %v1355
        %v1456 = vpop.f32.mrf.mxu0
        %v1457 = vadd.f32 %v1377, %v1456
        %v1458 = vpop.f32.mrf.mxu0
        %v1459 = vadd.f32 %v1377, %v1458
        %1460 = vmatmul.bf16.gmra.mxu0 %v1356
        %v1461 = vpop.f32.mrf.mxu0
        %v1462 = vadd.f32 %v1377, %v1461
        %v1463 = vpop.f32.mrf.mxu0
        %v1464 = vadd.f32 %v1377, %v1463
        %1465 = vmatmul.bf16.gmra.mxu0 %v1357
        %v1466 = vpop.f32.mrf.mxu0
        %v1467 = vadd.f32 %v1377, %v1466
        %v1468 = vpop.f32.mrf.mxu0
        %v1469 = vadd.f32 %v1377, %v1468
        %1470 = vmatmul.bf16.gmra.mxu0 %v1358
        %v1471 = vpop.f32.mrf.mxu0
        %v1472 = vadd.f32 %v1377, %v1471
        %v1473 = vpop.f32.mrf.mxu0
        %v1474 = vadd.f32 %v1377, %v1473
        %1475 = vdwg.mxu0
        %vm1476 = vcmask 64512
        %1477 = vst.msk [vmem:[%s712] sm:$0xff] %vm1476, %v1437
        %1478 = vst.msk [vmem:[%s712 + $0x8] sm:$0xff] %vm1476, %v1439
        %1479 = vst.msk [vmem:[%s712 + $0x10] sm:$0xff] %vm1476, %v1442
        %1480 = vst.msk [vmem:[%s712 + $0x18] sm:$0xff] %vm1476, %v1444
        %1481 = vst.msk [vmem:[%s712 + $0x20] sm:$0xff] %vm1476, %v1447
        %1482 = vst.msk [vmem:[%s712 + $0x28] sm:$0xff] %vm1476, %v1449
        %1483 = vst.msk [vmem:[%s712 + $0x30] sm:$0xff] %vm1476, %v1452
        %1484 = vst.msk [vmem:[%s712 + $0x38] sm:$0xff] %vm1476, %v1454
        %1485 = vst.msk [vmem:[%s712 + $0x40] sm:$0xff] %vm1476, %v1457
        %1486 = vst.msk [vmem:[%s712 + $0x48] sm:$0xff] %vm1476, %v1459
        %1487 = vst.msk [vmem:[%s712 + $0x50] sm:$0xff] %vm1476, %v1462
        %1488 = vst.msk [vmem:[%s712 + $0x58] sm:$0xff] %vm1476, %v1464
        %1489 = vst.msk [vmem:[%s712 + $0x60] sm:$0xff] %vm1476, %v1467
        %1490 = vst.msk [vmem:[%s712 + $0x68] sm:$0xff] %vm1476, %v1469
        %1491 = vst.msk [vmem:[%s712 + $0x70] sm:$0xff] %vm1476, %v1472
        %1492 = vst.msk [vmem:[%s712 + $0x78] sm:$0xff] %vm1476, %v1474
        %v1493 = vpack.c.bf16 %v1439, %v1437
        %v1494 = vpack.c.bf16 %v1444, %v1442
        %v1495 = vpack.c.bf16 %v1449, %v1447
        %v1496 = vpack.c.bf16 %v1454, %v1452
        %v1497 = vpack.c.bf16 %v1459, %v1457
        %v1498 = vpack.c.bf16 %v1464, %v1462
        %v1499 = vpack.c.bf16 %v1469, %v1467
        %v1500 = vpack.c.bf16 %v1474, %v1472
        %v1501 = vld [vmem:[#allocation6] sm:$0xf]
        %v1502 = vld [vmem:[#allocation6 + $0x4] sm:$0xf]
        %v1503 = vld [vmem:[#allocation6 + $0x8] sm:$0xf]
        %v1504 = vld [vmem:[#allocation6 + $0xc] sm:$0xf]
        %v1505 = vld [vmem:[#allocation6 + $0x10] sm:$0xf]
        %v1506 = vld [vmem:[#allocation6 + $0x14] sm:$0xf]
        %v1507 = vld [vmem:[#allocation6 + $0x18] sm:$0xf]
        %v1508 = vld [vmem:[#allocation6 + $0x1c] sm:$0xf]
        %v1509 = vld [vmem:[#allocation6 + $0x20] sm:$0xf]
        %v1510 = vld [vmem:[#allocation6 + $0x24] sm:$0xf]
        %v1511 = vld [vmem:[#allocation6 + $0x28] sm:$0xf]
        %v1512 = vld [vmem:[#allocation6 + $0x2c] sm:$0xf]
        %v1513 = vld [vmem:[#allocation6 + $0x30] sm:$0xf]
        %v1514 = vld [vmem:[#allocation6 + $0x34] sm:$0xf]
        %v1515 = vld [vmem:[#allocation6 + $0x38] sm:$0xf]
        %v1516 = vld [vmem:[#allocation6 + $0x3c] sm:$0xf]
        %v1517 = vld [vmem:[#allocation7] sm:$0x1]
        %v1519 = vperm.slane %v1517, 0
        %v1537 = vunpack.c.l.b16 %v1501
        %v1538 = vunpack.c.l.b16 %v1502
        %v1539 = vunpack.c.l.b16 %v1503
        %v1540 = vunpack.c.l.b16 %v1504
        %v1541 = vunpack.c.l.b16 %v1505
        %v1542 = vunpack.c.l.b16 %v1506
        %v1543 = vunpack.c.l.b16 %v1507
        %v1544 = vunpack.c.l.b16 %v1508
        %v1545 = vunpack.c.l.b16 %v1509
        %v1546 = vunpack.c.l.b16 %v1510
        %v1547 = vunpack.c.l.b16 %v1511
        %v1548 = vunpack.c.l.b16 %v1512
        %v1549 = vunpack.c.l.b16 %v1513
        %v1550 = vunpack.c.l.b16 %v1514
        %v1551 = vunpack.c.l.b16 %v1515
        %v1552 = vunpack.c.l.b16 %v1516
        %v1553 = vpack.c.b16 %v1538, %v1537
        %v1554 = vpack.c.b16 %v1540, %v1539
        %v1555 = vpack.c.b16 %v1542, %v1541
        %v1556 = vpack.c.b16 %v1544, %v1543
        %v1557 = vpack.c.b16 %v1546, %v1545
        %v1558 = vpack.c.b16 %v1548, %v1547
        %v1559 = vpack.c.b16 %v1550, %v1549
        %v1560 = vpack.c.b16 %v1552, %v1551
        %1569 = vmatpush.bf16.msra.mxu0 %v1560
        %1570 = vmatpush.bf16.msra.mxu0 %v1559
        %1571 = vmatpush.bf16.msra.mxu0 %v1558
        %1572 = vmatpush.bf16.msra.mxu0 %v1557
        %1573 = vmatpush.bf16.msra.mxu0 %v1556
        %1574 = vmatpush.bf16.msra.mxu0 %v1555
        %1575 = vmatpush.bf16.msra.mxu0 %v1554
        %1576 = vmatpush.bf16.msra.mxu0 %v1553
        %1577 = vmatmul.bf16.gmra.mxu0 %v1493
        %v1578 = vpop.f32.mrf.mxu0
        %v1579 = vadd.f32 %v1519, %v1578
        %v1580 = vpop.f32.mrf.mxu0
        %v1581 = vadd.f32 %v1519, %v1580
        %1582 = vmatmul.bf16.gmra.mxu0 %v1494
        %v1583 = vpop.f32.mrf.mxu0
        %v1584 = vadd.f32 %v1519, %v1583
        %v1585 = vpop.f32.mrf.mxu0
        %v1586 = vadd.f32 %v1519, %v1585
        %1587 = vmatmul.bf16.gmra.mxu0 %v1495
        %v1588 = vpop.f32.mrf.mxu0
        %v1589 = vadd.f32 %v1519, %v1588
        %v1590 = vpop.f32.mrf.mxu0
        %v1591 = vadd.f32 %v1519, %v1590
        %1592 = vmatmul.bf16.gmra.mxu0 %v1496
        %v1593 = vpop.f32.mrf.mxu0
        %v1594 = vadd.f32 %v1519, %v1593
        %v1595 = vpop.f32.mrf.mxu0
        %v1596 = vadd.f32 %v1519, %v1595
        %1597 = vmatmul.bf16.gmra.mxu0 %v1497
        %v1598 = vpop.f32.mrf.mxu0
        %v1599 = vadd.f32 %v1519, %v1598
        %v1600 = vpop.f32.mrf.mxu0
        %v1601 = vadd.f32 %v1519, %v1600
        %1602 = vmatmul.bf16.gmra.mxu0 %v1498
        %v1603 = vpop.f32.mrf.mxu0
        %v1604 = vadd.f32 %v1519, %v1603
        %v1605 = vpop.f32.mrf.mxu0
        %v1606 = vadd.f32 %v1519, %v1605
        %1607 = vmatmul.bf16.gmra.mxu0 %v1499
        %v1608 = vpop.f32.mrf.mxu0
        %v1609 = vadd.f32 %v1519, %v1608
        %v1610 = vpop.f32.mrf.mxu0
        %v1611 = vadd.f32 %v1519, %v1610
        %1612 = vmatmul.bf16.gmra.mxu0 %v1500
        %v1613 = vpop.f32.mrf.mxu0
        %v1614 = vadd.f32 %v1519, %v1613
        %v1615 = vpop.f32.mrf.mxu0
        %v1616 = vadd.f32 %v1519, %v1615
        %1617 = vdwg.mxu0
        %v1618 = vmax.f32 %v1579, 0.0
        %v1619 = vmax.f32 %v1581, 0.0
        %v1620 = vmax.f32 %v1584, 0.0
        %v1621 = vmax.f32 %v1586, 0.0
        %v1622 = vmax.f32 %v1589, 0.0
        %v1623 = vmax.f32 %v1591, 0.0
        %v1624 = vmax.f32 %v1594, 0.0
        %v1625 = vmax.f32 %v1596, 0.0
        %v1626 = vmax.f32 %v1599, 0.0
        %v1627 = vmax.f32 %v1601, 0.0
        %v1628 = vmax.f32 %v1604, 0.0
        %v1629 = vmax.f32 %v1606, 0.0
        %v1630 = vmax.f32 %v1609, 0.0
        %v1631 = vmax.f32 %v1611, 0.0
        %v1632 = vmax.f32 %v1614, 0.0
        %v1633 = vmax.f32 %v1616, 0.0
        %v1634 = vpack.c.bf16 %v1619, %v1618
        %v1635 = vpack.c.bf16 %v1621, %v1620
        %v1636 = vpack.c.bf16 %v1623, %v1622
        %v1637 = vpack.c.bf16 %v1625, %v1624
        %v1638 = vpack.c.bf16 %v1627, %v1626
        %v1639 = vpack.c.bf16 %v1629, %v1628
        %v1640 = vpack.c.bf16 %v1631, %v1630
        %v1641 = vpack.c.bf16 %v1633, %v1632
        %v1642 = vld [vmem:[#allocation9] sm:$0xf]
        %v1643 = vld [vmem:[#allocation9 + $0x4] sm:$0xf]
        %v1644 = vld [vmem:[#allocation9 + $0x8] sm:$0xf]
        %v1645 = vld [vmem:[#allocation9 + $0xc] sm:$0xf]
        %v1646 = vld [vmem:[#allocation9 + $0x10] sm:$0xf]
        %v1647 = vld [vmem:[#allocation9 + $0x14] sm:$0xf]
        %v1648 = vld [vmem:[#allocation9 + $0x18] sm:$0xf]
        %v1649 = vld [vmem:[#allocation9 + $0x1c] sm:$0xf]
        %v1650 = vld [vmem:[#allocation9 + $0x20] sm:$0xf]
        %v1651 = vld [vmem:[#allocation9 + $0x24] sm:$0xf]
        %v1652 = vld [vmem:[#allocation9 + $0x28] sm:$0xf]
        %v1653 = vld [vmem:[#allocation9 + $0x2c] sm:$0xf]
        %v1654 = vld [vmem:[#allocation9 + $0x30] sm:$0xf]
        %v1655 = vld [vmem:[#allocation9 + $0x34] sm:$0xf]
        %v1656 = vld [vmem:[#allocation9 + $0x38] sm:$0xf]
        %v1657 = vld [vmem:[#allocation9 + $0x3c] sm:$0xf]
        %v1658 = vld [vmem:[#allocation10] sm:$0x1]
        %v1660 = vperm.slane %v1658, 0
        %v1678 = vunpack.c.l.b16 %v1642
        %v1679 = vunpack.c.l.b16 %v1643
        %v1680 = vunpack.c.l.b16 %v1644
        %v1681 = vunpack.c.l.b16 %v1645
        %v1682 = vunpack.c.l.b16 %v1646
        %v1683 = vunpack.c.l.b16 %v1647
        %v1684 = vunpack.c.l.b16 %v1648
        %v1685 = vunpack.c.l.b16 %v1649
        %v1686 = vunpack.c.l.b16 %v1650
        %v1687 = vunpack.c.l.b16 %v1651
        %v1688 = vunpack.c.l.b16 %v1652
        %v1689 = vunpack.c.l.b16 %v1653
        %v1690 = vunpack.c.l.b16 %v1654
        %v1691 = vunpack.c.l.b16 %v1655
        %v1692 = vunpack.c.l.b16 %v1656
        %v1693 = vunpack.c.l.b16 %v1657
        %v1694 = vpack.c.b16 %v1679, %v1678
        %v1695 = vpack.c.b16 %v1681, %v1680
        %v1696 = vpack.c.b16 %v1683, %v1682
        %v1697 = vpack.c.b16 %v1685, %v1684
        %v1698 = vpack.c.b16 %v1687, %v1686
        %v1699 = vpack.c.b16 %v1689, %v1688
        %v1700 = vpack.c.b16 %v1691, %v1690
        %v1701 = vpack.c.b16 %v1693, %v1692
        %1710 = vmatpush.bf16.msra.mxu0 %v1701
        %1711 = vmatpush.bf16.msra.mxu0 %v1700
        %1712 = vmatpush.bf16.msra.mxu0 %v1699
        %1713 = vmatpush.bf16.msra.mxu0 %v1698
        %1714 = vmatpush.bf16.msra.mxu0 %v1697
        %1715 = vmatpush.bf16.msra.mxu0 %v1696
        %1716 = vmatpush.bf16.msra.mxu0 %v1695
        %1717 = vmatpush.bf16.msra.mxu0 %v1694
        %1718 = vmatmul.bf16.gmra.mxu0 %v1634
        %v1719 = vpop.f32.mrf.mxu0
        %v1720 = vadd.f32 %v1660, %v1719
        %v1721 = vpop.f32.mrf.mxu0
        %v1722 = vadd.f32 %v1660, %v1721
        %1723 = vmatmul.bf16.gmra.mxu0 %v1635
        %v1724 = vpop.f32.mrf.mxu0
        %v1725 = vadd.f32 %v1660, %v1724
        %v1726 = vpop.f32.mrf.mxu0
        %v1727 = vadd.f32 %v1660, %v1726
        %1728 = vmatmul.bf16.gmra.mxu0 %v1636
        %v1729 = vpop.f32.mrf.mxu0
        %v1730 = vadd.f32 %v1660, %v1729
        %v1731 = vpop.f32.mrf.mxu0
        %v1732 = vadd.f32 %v1660, %v1731
        %1733 = vmatmul.bf16.gmra.mxu0 %v1637
        %v1734 = vpop.f32.mrf.mxu0
        %v1735 = vadd.f32 %v1660, %v1734
        %v1736 = vpop.f32.mrf.mxu0
        %v1737 = vadd.f32 %v1660, %v1736
        %1738 = vmatmul.bf16.gmra.mxu0 %v1638
        %v1739 = vpop.f32.mrf.mxu0
        %v1740 = vadd.f32 %v1660, %v1739
        %v1741 = vpop.f32.mrf.mxu0
        %v1742 = vadd.f32 %v1660, %v1741
        %1743 = vmatmul.bf16.gmra.mxu0 %v1639
        %v1744 = vpop.f32.mrf.mxu0
        %v1745 = vadd.f32 %v1660, %v1744
        %v1746 = vpop.f32.mrf.mxu0
        %v1747 = vadd.f32 %v1660, %v1746
        %1748 = vmatmul.bf16.gmra.mxu0 %v1640
        %v1749 = vpop.f32.mrf.mxu0
        %v1750 = vadd.f32 %v1660, %v1749
        %v1751 = vpop.f32.mrf.mxu0
        %v1752 = vadd.f32 %v1660, %v1751
        %1753 = vmatmul.bf16.gmra.mxu0 %v1641
        %v1754 = vpop.f32.mrf.mxu0
        %v1755 = vadd.f32 %v1660, %v1754
        %v1756 = vpop.f32.mrf.mxu0
        %v1757 = vadd.f32 %v1660, %v1756
        %1758 = vdwg.mxu0
        %v1759 = vmax.f32 %v1720, 0.0
        %v1760 = vmax.f32 %v1722, 0.0
        %v1761 = vmax.f32 %v1725, 0.0
        %v1762 = vmax.f32 %v1727, 0.0
        %v1763 = vmax.f32 %v1730, 0.0
        %v1764 = vmax.f32 %v1732, 0.0
        %v1765 = vmax.f32 %v1735, 0.0
        %v1766 = vmax.f32 %v1737, 0.0
        %v1767 = vmax.f32 %v1740, 0.0
        %v1768 = vmax.f32 %v1742, 0.0
        %v1769 = vmax.f32 %v1745, 0.0
        %v1770 = vmax.f32 %v1747, 0.0
        %v1771 = vmax.f32 %v1750, 0.0
        %v1772 = vmax.f32 %v1752, 0.0
        %v1773 = vmax.f32 %v1755, 0.0
        %v1774 = vmax.f32 %v1757, 0.0
        %v1775 = vpack.c.bf16 %v1760, %v1759
        %v1776 = vpack.c.bf16 %v1762, %v1761
        %v1777 = vpack.c.bf16 %v1764, %v1763
        %v1778 = vpack.c.bf16 %v1766, %v1765
        %v1779 = vpack.c.bf16 %v1768, %v1767
        %v1780 = vpack.c.bf16 %v1770, %v1769
        %v1781 = vpack.c.bf16 %v1772, %v1771
        %v1782 = vpack.c.bf16 %v1774, %v1773
        %v1783 = vld [vmem:[%s13] sm:$0xff]
        %v1784 = vld [vmem:[%s13 + $0x8] sm:$0xff]
        %v1785 = vld [vmem:[%s13 + $0x10] sm:$0xff]
        %v1786 = vld [vmem:[%s13 + $0x18] sm:$0xff]
        %v1787 = vld [vmem:[%s13 + $0x20] sm:$0xff]
        %v1788 = vld [vmem:[%s13 + $0x28] sm:$0xff]
        %v1789 = vld [vmem:[%s13 + $0x30] sm:$0xff]
        %v1790 = vld [vmem:[%s13 + $0x38] sm:$0xff]
        %v1791 = vld [vmem:[%s13 + $0x40] sm:$0xff]
        %v1792 = vld [vmem:[%s13 + $0x48] sm:$0xff]
        %v1793 = vld [vmem:[%s13 + $0x50] sm:$0xff]
        %v1794 = vld [vmem:[%s13 + $0x58] sm:$0xff]
        %v1795 = vld [vmem:[%s13 + $0x60] sm:$0xff]
        %v1796 = vld [vmem:[%s13 + $0x68] sm:$0xff]
        %v1797 = vld [vmem:[%s13 + $0x70] sm:$0xff]
        %v1798 = vld [vmem:[%s13 + $0x78] sm:$0xff]
        %v1799 = vld [vmem:[#allocation12] sm:$0x3]
        %v1801 = vperm.slane %v1799, 0
        %v1802 = vperm.slane %v1799, 1
        %v1821 = vunpack.c.l.b16 %v1783
        %v1822 = vunpack.c.h.b16 %v1783
        %v1823 = vunpack.c.l.b16 %v1784
        %v1824 = vunpack.c.h.b16 %v1784
        %v1825 = vunpack.c.l.b16 %v1785
        %v1826 = vunpack.c.h.b16 %v1785
        %v1827 = vunpack.c.l.b16 %v1786
        %v1828 = vunpack.c.h.b16 %v1786
        %v1829 = vunpack.c.l.b16 %v1787
        %v1830 = vunpack.c.h.b16 %v1787
        %v1831 = vunpack.c.l.b16 %v1788
        %v1832 = vunpack.c.h.b16 %v1788
        %v1833 = vunpack.c.l.b16 %v1789
        %v1834 = vunpack.c.h.b16 %v1789
        %v1835 = vunpack.c.l.b16 %v1790
        %v1836 = vunpack.c.h.b16 %v1790
        %v1837 = vunpack.c.l.b16 %v1791
        %v1838 = vunpack.c.h.b16 %v1791
        %v1839 = vunpack.c.l.b16 %v1792
        %v1840 = vunpack.c.h.b16 %v1792
        %v1841 = vunpack.c.l.b16 %v1793
        %v1842 = vunpack.c.h.b16 %v1793
        %v1843 = vunpack.c.l.b16 %v1794
        %v1844 = vunpack.c.h.b16 %v1794
        %v1845 = vunpack.c.l.b16 %v1795
        %v1846 = vunpack.c.h.b16 %v1795
        %v1847 = vunpack.c.l.b16 %v1796
        %v1848 = vunpack.c.h.b16 %v1796
        %v1849 = vunpack.c.l.b16 %v1797
        %v1850 = vunpack.c.h.b16 %v1797
        %v1851 = vunpack.c.l.b16 %v1798
        %v1852 = vunpack.c.h.b16 %v1798
        %v1853 = vpack.c.b16 %v1823, %v1821
        %v1854 = vpack.c.b16 %v1824, %v1822
        %v1855 = vpack.c.b16 %v1827, %v1825
        %v1856 = vpack.c.b16 %v1828, %v1826
        %v1857 = vpack.c.b16 %v1831, %v1829
        %v1858 = vpack.c.b16 %v1832, %v1830
        %v1859 = vpack.c.b16 %v1835, %v1833
        %v1860 = vpack.c.b16 %v1836, %v1834
        %v1861 = vpack.c.b16 %v1839, %v1837
        %v1862 = vpack.c.b16 %v1840, %v1838
        %v1863 = vpack.c.b16 %v1843, %v1841
        %v1864 = vpack.c.b16 %v1844, %v1842
        %v1865 = vpack.c.b16 %v1847, %v1845
        %v1866 = vpack.c.b16 %v1848, %v1846
        %v1867 = vpack.c.b16 %v1851, %v1849
        %v1868 = vpack.c.b16 %v1852, %v1850
        %1885 = vmatpush.bf16.msra.mxu0 %v1867
        %1886 = vmatpush.bf16.msra.mxu0 %v1865
        %1887 = vmatpush.bf16.msra.mxu0 %v1863
        %1888 = vmatpush.bf16.msra.mxu0 %v1861
        %1889 = vmatpush.bf16.msra.mxu0 %v1859
        %1890 = vmatpush.bf16.msra.mxu0 %v1857
        %1891 = vmatpush.bf16.msra.mxu0 %v1855
        %1892 = vmatpush.bf16.msra.mxu0 %v1853
        %1893 = vmatmul.bf16.gmra.mxu0 %v1775
        %v1894 = vpop.f32.mrf.mxu0
        %v1895 = vadd.f32 %v1801, %v1894
        %v1896 = vpop.f32.mrf.mxu0
        %v1897 = vadd.f32 %v1801, %v1896
        %1898 = vmatmul.bf16.gmra.mxu0 %v1776
        %v1899 = vpop.f32.mrf.mxu0
        %v1900 = vadd.f32 %v1801, %v1899
        %v1901 = vpop.f32.mrf.mxu0
        %v1902 = vadd.f32 %v1801, %v1901
        %1903 = vmatmul.bf16.gmra.mxu0 %v1777
        %v1904 = vpop.f32.mrf.mxu0
        %v1905 = vadd.f32 %v1801, %v1904
        %v1906 = vpop.f32.mrf.mxu0
        %v1907 = vadd.f32 %v1801, %v1906
        %1908 = vmatmul.bf16.gmra.mxu0 %v1778
        %v1909 = vpop.f32.mrf.mxu0
        %v1910 = vadd.f32 %v1801, %v1909
        %v1911 = vpop.f32.mrf.mxu0
        %v1912 = vadd.f32 %v1801, %v1911
        %1913 = vmatmul.bf16.gmra.mxu0 %v1779
        %v1914 = vpop.f32.mrf.mxu0
        %v1915 = vadd.f32 %v1801, %v1914
        %v1916 = vpop.f32.mrf.mxu0
        %v1917 = vadd.f32 %v1801, %v1916
        %1918 = vmatmul.bf16.gmra.mxu0 %v1780
        %v1919 = vpop.f32.mrf.mxu0
        %v1920 = vadd.f32 %v1801, %v1919
        %v1921 = vpop.f32.mrf.mxu0
        %v1922 = vadd.f32 %v1801, %v1921
        %1923 = vmatmul.bf16.gmra.mxu0 %v1781
        %v1924 = vpop.f32.mrf.mxu0
        %v1925 = vadd.f32 %v1801, %v1924
        %v1926 = vpop.f32.mrf.mxu0
        %v1927 = vadd.f32 %v1801, %v1926
        %1928 = vmatmul.bf16.gmra.mxu0 %v1782
        %v1929 = vpop.f32.mrf.mxu0
        %v1930 = vadd.f32 %v1801, %v1929
        %v1931 = vpop.f32.mrf.mxu0
        %v1932 = vadd.f32 %v1801, %v1931
        %1933 = vdwg.mxu0
        %1934 = vmatpush.bf16.msra.mxu0 %v1868
        %1935 = vmatpush.bf16.msra.mxu0 %v1866
        %1936 = vmatpush.bf16.msra.mxu0 %v1864
        %1937 = vmatpush.bf16.msra.mxu0 %v1862
        %1938 = vmatpush.bf16.msra.mxu0 %v1860
        %1939 = vmatpush.bf16.msra.mxu0 %v1858
        %1940 = vmatpush.bf16.msra.mxu0 %v1856
        %1941 = vmatpush.bf16.msra.mxu0 %v1854
        %1942 = vmatmul.bf16.gmra.mxu0 %v1775
        %v1943 = vpop.f32.mrf.mxu0
        %v1944 = vadd.f32 %v1802, %v1943
        %v1945 = vpop.f32.mrf.mxu0
        %v1946 = vadd.f32 %v1802, %v1945
        %1947 = vmatmul.bf16.gmra.mxu0 %v1776
        %v1948 = vpop.f32.mrf.mxu0
        %v1949 = vadd.f32 %v1802, %v1948
        %v1950 = vpop.f32.mrf.mxu0
        %v1951 = vadd.f32 %v1802, %v1950
        %1952 = vmatmul.bf16.gmra.mxu0 %v1777
        %v1953 = vpop.f32.mrf.mxu0
        %v1954 = vadd.f32 %v1802, %v1953
        %v1955 = vpop.f32.mrf.mxu0
        %v1956 = vadd.f32 %v1802, %v1955
        %1957 = vmatmul.bf16.gmra.mxu0 %v1778
        %v1958 = vpop.f32.mrf.mxu0
        %v1959 = vadd.f32 %v1802, %v1958
        %v1960 = vpop.f32.mrf.mxu0
        %v1961 = vadd.f32 %v1802, %v1960
        %1962 = vmatmul.bf16.gmra.mxu0 %v1779
        %v1963 = vpop.f32.mrf.mxu0
        %v1964 = vadd.f32 %v1802, %v1963
        %v1965 = vpop.f32.mrf.mxu0
        %v1966 = vadd.f32 %v1802, %v1965
        %1967 = vmatmul.bf16.gmra.mxu0 %v1780
        %v1968 = vpop.f32.mrf.mxu0
        %v1969 = vadd.f32 %v1802, %v1968
        %v1970 = vpop.f32.mrf.mxu0
        %v1971 = vadd.f32 %v1802, %v1970
        %1972 = vmatmul.bf16.gmra.mxu0 %v1781
        %v1973 = vpop.f32.mrf.mxu0
        %v1974 = vadd.f32 %v1802, %v1973
        %v1975 = vpop.f32.mrf.mxu0
        %v1976 = vadd.f32 %v1802, %v1975
        %1977 = vmatmul.bf16.gmra.mxu0 %v1782
        %v1978 = vpop.f32.mrf.mxu0
        %v1979 = vadd.f32 %v1802, %v1978
        %v1980 = vpop.f32.mrf.mxu0
        %v1981 = vadd.f32 %v1802, %v1980
        %1982 = vdwg.mxu0
        %v1983 = vmax.f32 %v1895, 0.0
        %v1984 = vmax.f32 %v1944, 0.0
        %v1985 = vmax.f32 %v1897, 0.0
        %v1986 = vmax.f32 %v1946, 0.0
        %v1987 = vmax.f32 %v1900, 0.0
        %v1988 = vmax.f32 %v1949, 0.0
        %v1989 = vmax.f32 %v1902, 0.0
        %v1990 = vmax.f32 %v1951, 0.0
        %v1991 = vmax.f32 %v1905, 0.0
        %v1992 = vmax.f32 %v1954, 0.0
        %v1993 = vmax.f32 %v1907, 0.0
        %v1994 = vmax.f32 %v1956, 0.0
        %v1995 = vmax.f32 %v1910, 0.0
        %v1996 = vmax.f32 %v1959, 0.0
        %v1997 = vmax.f32 %v1912, 0.0
        %v1998 = vmax.f32 %v1961, 0.0
        %v1999 = vmax.f32 %v1915, 0.0
        %v2000 = vmax.f32 %v1964, 0.0
        %v2001 = vmax.f32 %v1917, 0.0
        %v2002 = vmax.f32 %v1966, 0.0
        %v2003 = vmax.f32 %v1920, 0.0
        %v2004 = vmax.f32 %v1969, 0.0
        %v2005 = vmax.f32 %v1922, 0.0
        %v2006 = vmax.f32 %v1971, 0.0
        %v2007 = vmax.f32 %v1925, 0.0
        %v2008 = vmax.f32 %v1974, 0.0
        %v2009 = vmax.f32 %v1927, 0.0
        %v2010 = vmax.f32 %v1976, 0.0
        %v2011 = vmax.f32 %v1930, 0.0
        %v2012 = vmax.f32 %v1979, 0.0
        %v2013 = vmax.f32 %v1932, 0.0
        %v2014 = vmax.f32 %v1981, 0.0
        %v2015 = vpack.c.bf16 %v1985, %v1983
        %v2016 = vpack.c.bf16 %v1986, %v1984
        %v2017 = vpack.c.bf16 %v1989, %v1987
        %v2018 = vpack.c.bf16 %v1990, %v1988
        %v2019 = vpack.c.bf16 %v1993, %v1991
        %v2020 = vpack.c.bf16 %v1994, %v1992
        %v2021 = vpack.c.bf16 %v1997, %v1995
        %v2022 = vpack.c.bf16 %v1998, %v1996
        %v2023 = vpack.c.bf16 %v2001, %v1999
        %v2024 = vpack.c.bf16 %v2002, %v2000
        %v2025 = vpack.c.bf16 %v2005, %v2003
        %v2026 = vpack.c.bf16 %v2006, %v2004
        %v2027 = vpack.c.bf16 %v2009, %v2007
        %v2028 = vpack.c.bf16 %v2010, %v2008
        %v2029 = vpack.c.bf16 %v2013, %v2011
        %v2030 = vpack.c.bf16 %v2014, %v2012
        %v2031 = vld [vmem:[%s15] sm:$0xf]
        %v2032 = vld [vmem:[%s15 + $0x4] sm:$0xf]
        %v2033 = vld [vmem:[%s15 + $0x8] sm:$0xf]
        %v2034 = vld [vmem:[%s15 + $0xc] sm:$0xf]
        %v2035 = vld [vmem:[%s15 + $0x10] sm:$0xf]
        %v2036 = vld [vmem:[%s15 + $0x14] sm:$0xf]
        %v2037 = vld [vmem:[%s15 + $0x18] sm:$0xf]
        %v2038 = vld [vmem:[%s15 + $0x1c] sm:$0xf]
        %v2039 = vld [vmem:[%s15 + $0x20] sm:$0xf]
        %v2040 = vld [vmem:[%s15 + $0x24] sm:$0xf]
        %v2041 = vld [vmem:[%s15 + $0x28] sm:$0xf]
        %v2042 = vld [vmem:[%s15 + $0x2c] sm:$0xf]
        %v2043 = vld [vmem:[%s15 + $0x30] sm:$0xf]
        %v2044 = vld [vmem:[%s15 + $0x34] sm:$0xf]
        %v2045 = vld [vmem:[%s15 + $0x38] sm:$0xf]
        %v2046 = vld [vmem:[%s15 + $0x3c] sm:$0xf]
        %v2047 = vld [vmem:[%s15 + $0x40] sm:$0xf]
        %v2048 = vld [vmem:[%s15 + $0x44] sm:$0xf]
        %v2049 = vld [vmem:[%s15 + $0x48] sm:$0xf]
        %v2050 = vld [vmem:[%s15 + $0x4c] sm:$0xf]
        %v2051 = vld [vmem:[%s15 + $0x50] sm:$0xf]
        %v2052 = vld [vmem:[%s15 + $0x54] sm:$0xf]
        %v2053 = vld [vmem:[%s15 + $0x58] sm:$0xf]
        %v2054 = vld [vmem:[%s15 + $0x5c] sm:$0xf]
        %v2055 = vld [vmem:[%s15 + $0x60] sm:$0xf]
        %v2056 = vld [vmem:[%s15 + $0x64] sm:$0xf]
        %v2057 = vld [vmem:[%s15 + $0x68] sm:$0xf]
        %v2058 = vld [vmem:[%s15 + $0x6c] sm:$0xf]
        %v2059 = vld [vmem:[%s15 + $0x70] sm:$0xf]
        %v2060 = vld [vmem:[%s15 + $0x74] sm:$0xf]
        %v2061 = vld [vmem:[%s15 + $0x78] sm:$0xf]
        %v2062 = vld [vmem:[%s15 + $0x7c] sm:$0xf]
        %v2063 = vld [vmem:[#allocation13] sm:$0x1]
        %v2065 = vperm.slane %v2063, 0
        %v2099 = vunpack.c.l.b16 %v2031
        %v2100 = vunpack.c.l.b16 %v2032
        %v2101 = vunpack.c.l.b16 %v2033
        %v2102 = vunpack.c.l.b16 %v2034
        %v2103 = vunpack.c.l.b16 %v2035
        %v2104 = vunpack.c.l.b16 %v2036
        %v2105 = vunpack.c.l.b16 %v2037
        %v2106 = vunpack.c.l.b16 %v2038
        %v2107 = vunpack.c.l.b16 %v2039
        %v2108 = vunpack.c.l.b16 %v2040
        %v2109 = vunpack.c.l.b16 %v2041
        %v2110 = vunpack.c.l.b16 %v2042
        %v2111 = vunpack.c.l.b16 %v2043
        %v2112 = vunpack.c.l.b16 %v2044
        %v2113 = vunpack.c.l.b16 %v2045
        %v2114 = vunpack.c.l.b16 %v2046
        %v2115 = vunpack.c.l.b16 %v2047
        %v2116 = vunpack.c.l.b16 %v2048
        %v2117 = vunpack.c.l.b16 %v2049
        %v2118 = vunpack.c.l.b16 %v2050
        %v2119 = vunpack.c.l.b16 %v2051
        %v2120 = vunpack.c.l.b16 %v2052
        %v2121 = vunpack.c.l.b16 %v2053
        %v2122 = vunpack.c.l.b16 %v2054
        %v2123 = vunpack.c.l.b16 %v2055
        %v2124 = vunpack.c.l.b16 %v2056
        %v2125 = vunpack.c.l.b16 %v2057
        %v2126 = vunpack.c.l.b16 %v2058
        %v2127 = vunpack.c.l.b16 %v2059
        %v2128 = vunpack.c.l.b16 %v2060
        %v2129 = vunpack.c.l.b16 %v2061
        %v2130 = vunpack.c.l.b16 %v2062
        %v2131 = vpack.c.b16 %v2100, %v2099
        %v2132 = vpack.c.b16 %v2102, %v2101
        %v2133 = vpack.c.b16 %v2104, %v2103
        %v2134 = vpack.c.b16 %v2106, %v2105
        %v2135 = vpack.c.b16 %v2108, %v2107
        %v2136 = vpack.c.b16 %v2110, %v2109
        %v2137 = vpack.c.b16 %v2112, %v2111
        %v2138 = vpack.c.b16 %v2114, %v2113
        %v2139 = vpack.c.b16 %v2116, %v2115
        %v2140 = vpack.c.b16 %v2118, %v2117
        %v2141 = vpack.c.b16 %v2120, %v2119
        %v2142 = vpack.c.b16 %v2122, %v2121
        %v2143 = vpack.c.b16 %v2124, %v2123
        %v2144 = vpack.c.b16 %v2126, %v2125
        %v2145 = vpack.c.b16 %v2128, %v2127
        %v2146 = vpack.c.b16 %v2130, %v2129
        %2163 = vmatpush.bf16.msra.mxu0 %v2138
        %2164 = vmatpush.bf16.msra.mxu0 %v2137
        %2165 = vmatpush.bf16.msra.mxu0 %v2136
        %2166 = vmatpush.bf16.msra.mxu0 %v2135
        %2167 = vmatpush.bf16.msra.mxu0 %v2134
        %2168 = vmatpush.bf16.msra.mxu0 %v2133
        %2169 = vmatpush.bf16.msra.mxu0 %v2132
        %2170 = vmatpush.bf16.msra.mxu0 %v2131
        %2171 = vmatmul.bf16.gmra.mxu0 %v2015
        %v2172 = vpop.f32.mrf.mxu0
        %v2173 = vadd.f32 %v2065, %v2172
        %v2174 = vpop.f32.mrf.mxu0
        %v2175 = vadd.f32 %v2065, %v2174
        %2176 = vmatmul.bf16.gmra.mxu0 %v2017
        %v2177 = vpop.f32.mrf.mxu0
        %v2178 = vadd.f32 %v2065, %v2177
        %v2179 = vpop.f32.mrf.mxu0
        %v2180 = vadd.f32 %v2065, %v2179
        %2181 = vmatmul.bf16.gmra.mxu0 %v2019
        %v2182 = vpop.f32.mrf.mxu0
        %v2183 = vadd.f32 %v2065, %v2182
        %v2184 = vpop.f32.mrf.mxu0
        %v2185 = vadd.f32 %v2065, %v2184
        %2186 = vmatmul.bf16.gmra.mxu0 %v2021
        %v2187 = vpop.f32.mrf.mxu0
        %v2188 = vadd.f32 %v2065, %v2187
        %v2189 = vpop.f32.mrf.mxu0
        %v2190 = vadd.f32 %v2065, %v2189
        %2191 = vmatmul.bf16.gmra.mxu0 %v2023
        %v2192 = vpop.f32.mrf.mxu0
        %v2193 = vadd.f32 %v2065, %v2192
        %v2194 = vpop.f32.mrf.mxu0
        %v2195 = vadd.f32 %v2065, %v2194
        %2196 = vmatmul.bf16.gmra.mxu0 %v2025
        %v2197 = vpop.f32.mrf.mxu0
        %v2198 = vadd.f32 %v2065, %v2197
        %v2199 = vpop.f32.mrf.mxu0
        %v2200 = vadd.f32 %v2065, %v2199
        %2201 = vmatmul.bf16.gmra.mxu0 %v2027
        %v2202 = vpop.f32.mrf.mxu0
        %v2203 = vadd.f32 %v2065, %v2202
        %v2204 = vpop.f32.mrf.mxu0
        %v2205 = vadd.f32 %v2065, %v2204
        %2206 = vmatmul.bf16.gmra.mxu0 %v2029
        %v2207 = vpop.f32.mrf.mxu0
        %v2208 = vadd.f32 %v2065, %v2207
        %v2209 = vpop.f32.mrf.mxu0
        %v2210 = vadd.f32 %v2065, %v2209
        %2211 = vdwg.mxu0
        %2212 = vmatpush.bf16.msra.mxu0 %v2146
        %2213 = vmatpush.bf16.msra.mxu0 %v2145
        %2214 = vmatpush.bf16.msra.mxu0 %v2144
        %2215 = vmatpush.bf16.msra.mxu0 %v2143
        %2216 = vmatpush.bf16.msra.mxu0 %v2142
        %2217 = vmatpush.bf16.msra.mxu0 %v2141
        %2218 = vmatpush.bf16.msra.mxu0 %v2140
        %2219 = vmatpush.bf16.msra.mxu0 %v2139
        %2220 = vmatmul.bf16.gmra.mxu0 %v2016
        %v2221 = vpop.f32.mrf.mxu0
        %v2222 = vadd.f32 %v2173, %v2221
        %v2223 = vpop.f32.mrf.mxu0
        %v2224 = vadd.f32 %v2175, %v2223
        %2225 = vmatmul.bf16.gmra.mxu0 %v2018
        %v2226 = vpop.f32.mrf.mxu0
        %v2227 = vadd.f32 %v2178, %v2226
        %v2228 = vpop.f32.mrf.mxu0
        %v2229 = vadd.f32 %v2180, %v2228
        %2230 = vmatmul.bf16.gmra.mxu0 %v2020
        %v2231 = vpop.f32.mrf.mxu0
        %v2232 = vadd.f32 %v2183, %v2231
        %v2233 = vpop.f32.mrf.mxu0
        %v2234 = vadd.f32 %v2185, %v2233
        %2235 = vmatmul.bf16.gmra.mxu0 %v2022
        %v2236 = vpop.f32.mrf.mxu0
        %v2237 = vadd.f32 %v2188, %v2236
        %v2238 = vpop.f32.mrf.mxu0
        %v2239 = vadd.f32 %v2190, %v2238
        %2240 = vmatmul.bf16.gmra.mxu0 %v2024
        %v2241 = vpop.f32.mrf.mxu0
        %v2242 = vadd.f32 %v2193, %v2241
        %v2243 = vpop.f32.mrf.mxu0
        %v2244 = vadd.f32 %v2195, %v2243
        %2245 = vmatmul.bf16.gmra.mxu0 %v2026
        %v2246 = vpop.f32.mrf.mxu0
        %v2247 = vadd.f32 %v2198, %v2246
        %v2248 = vpop.f32.mrf.mxu0
        %v2249 = vadd.f32 %v2200, %v2248
        %2250 = vmatmul.bf16.gmra.mxu0 %v2028
        %v2251 = vpop.f32.mrf.mxu0
        %v2252 = vadd.f32 %v2203, %v2251
        %v2253 = vpop.f32.mrf.mxu0
        %v2254 = vadd.f32 %v2205, %v2253
        %2255 = vmatmul.bf16.gmra.mxu0 %v2030
        %v2256 = vpop.f32.mrf.mxu0
        %v2257 = vadd.f32 %v2208, %v2256
        %v2258 = vpop.f32.mrf.mxu0
        %v2259 = vadd.f32 %v2210, %v2258
        %2260 = vdwg.mxu0
        %2261 = vst.msk [vmem:[%s706] sm:$0xff] %vm793, %v2222
        %2262 = vst.msk [vmem:[%s706 + $0x8] sm:$0xff] %vm793, %v2224
        %2263 = vst.msk [vmem:[%s706 + $0x10] sm:$0xff] %vm793, %v2227
        %2264 = vst.msk [vmem:[%s706 + $0x18] sm:$0xff] %vm793, %v2229
        %2265 = vst.msk [vmem:[%s706 + $0x20] sm:$0xff] %vm793, %v2232
        %2266 = vst.msk [vmem:[%s706 + $0x28] sm:$0xff] %vm793, %v2234
        %2267 = vst.msk [vmem:[%s706 + $0x30] sm:$0xff] %vm793, %v2237
        %2268 = vst.msk [vmem:[%s706 + $0x38] sm:$0xff] %vm793, %v2239
        %2269 = vst.msk [vmem:[%s706 + $0x40] sm:$0xff] %vm793, %v2242
        %2270 = vst.msk [vmem:[%s706 + $0x48] sm:$0xff] %vm793, %v2244
        %2271 = vst.msk [vmem:[%s706 + $0x50] sm:$0xff] %vm793, %v2247
        %2272 = vst.msk [vmem:[%s706 + $0x58] sm:$0xff] %vm793, %v2249
        %2273 = vst.msk [vmem:[%s706 + $0x60] sm:$0xff] %vm793, %v2252
        %2274 = vst.msk [vmem:[%s706 + $0x68] sm:$0xff] %vm793, %v2254
        %2275 = vst.msk [vmem:[%s706 + $0x70] sm:$0xff] %vm793, %v2257
        %2276 = vst.msk [vmem:[%s706 + $0x78] sm:$0xff] %vm793, %v2259
        %s2277 = smul.u32 16, %s35
        %p2278 = scmp.lt.s32.totalorder %s2277, 31
        %s2279 = scalar_select %p2278, %s2277, 31
        %s2280 = smul.addr %s2279, 8
        %s2281 = scalar_lea.vmem %s17, %s2280
        %s2282 = smul.u32 16, %s35
        %p2283 = scmp.lt.s32.totalorder %s2282, 31
        %s2284 = scalar_select %p2283, %s2282, 31
        %s2285 = smul.addr %s2284, 8
        %s2286 = scalar_lea.vmem %s18, %s2285
        // Predicated region
        $region121: #{text_autoencoder_forward.1} parent=87 // pred_check
          %p2287 = pneg %p415
        $region122: #{text_autoencoder_forward.1} parent=87 // pred_check_branch
          %2289 = sbr.rel (%p2287) target = $region124
        $region123: #{text_autoencoder_forward.1} parent=87 // pred_region
          %s2290 = smul.u32 16, %s35
        $region124: #{text_autoencoder_forward.1} parent=87 // pred_fallthru
          _
        // Predicated region
        $region125: #{text_autoencoder_forward.1} parent=87 // pred_check
          %p2291 = pneg %p441
        $region126: #{text_autoencoder_forward.1} parent=87 // pred_check_branch
          %2293 = sbr.rel (%p2291) target = $region128
        $region127: #{text_autoencoder_forward.1} parent=87 // pred_region
          %s2294 = smul.u32 16, %s35
        $region128: #{text_autoencoder_forward.1} parent=87 // pred_fallthru
          _
      $region88: #{text_autoencoder_forward.1} parent=5 // pred_fallthru
        _
      %p2295 = scmp.le.s32.totalorder 2, %s30
      // Predicated region
      $region129: #{text_autoencoder_forward.1} parent=5 // pred_check
        %p2296 = pneg %p2295
      $region130: #{text_autoencoder_forward.1} parent=5 // pred_check_branch
        %2298 = sbr.rel (%p2296) target = $region132
      $region131: #{text_autoencoder_forward.1} parent=5 // pred_region
        %s2299 = ssub.s32 %s30, 2
        // Predicated region
        $region133: #{text_autoencoder_forward.1} parent=131 // pred_check
          %p2300 = pneg %p421
        $region134: #{text_autoencoder_forward.1} parent=131 // pred_check_branch
          %2302 = sbr.rel (%p2300) target = $region136
        $region135: #{text_autoencoder_forward.1} parent=131 // pred_region
          %s2303 = smul.u32 16, %s36
          %p2304 = scmp.lt.s32.totalorder %s2303, 31
          %s2305 = scalar_select %p2304, %s2303, 31
          %s2306 = smul.addr %s2305, 8
          %s2307 = scalar_lea.vmem %s17, %s2306
        $region136: #{text_autoencoder_forward.1} parent=131 // pred_fallthru
          _
        // Predicated region
        $region137: #{text_autoencoder_forward.1} parent=131 // pred_check
          %p2308 = pneg %p447
        $region138: #{text_autoencoder_forward.1} parent=131 // pred_check_branch
          %2310 = sbr.rel (%p2308) target = $region140
        $region139: #{text_autoencoder_forward.1} parent=131 // pred_region
          %s2311 = smul.u32 16, %s36
          %p2312 = scmp.lt.s32.totalorder %s2311, 31
          %s2313 = scalar_select %p2312, %s2311, 31
          %s2314 = smul.addr %s2313, 8
          %s2315 = scalar_lea.vmem %s18, %s2314
        $region140: #{text_autoencoder_forward.1} parent=131 // pred_fallthru
          _
      $region132: #{text_autoencoder_forward.1} parent=5 // pred_fallthru
        _
    $region6: #{text_autoencoder_forward.1} parent=1 // loop_footer
      %s34 = sadd.s32 1, %s30
    $region7: #{text_autoencoder_forward.1} parent=1 // loop_footer_branch
      %29 = sbr.rel target = $region3
    $region8: #{text_autoencoder_forward.1} parent=1 // loop_exit
      _
    %2316 = vsyncpa [#allocation3], 1
    %s2317 = scalar_lea.sflag [#allocation3], 1
    %2318 = vsyncpa %s2317, 1
    %2319 = vsyncpa [#allocation5], 1
    %2320 = vsyncpa [#allocation8], 1
    %2321 = vsyncpa [#allocation11], 1
    %2322 = vsyncpa [#allocation14], 1

</llo_original>
